<compile_context>
chip_gen: v7x
topology: tpu7x:2x2x1
jax: 0.10.0
libtpu: 0.0.40
codegen_flags: <defaults>
</compile_context>

<pallas_src>
import numpy as np
import jax
import jax.numpy as jnp
from jax.experimental import pallas as pl
from jax.experimental.pallas import tpu as pltpu


def res_block_kernel(x_ref, m1_ref, m2_ref, g1_ref, be1_ref, g2_ref, be2_ref,
                     alpha_ref, out_ref, pad_ref):
    NH, WC = x_ref.shape                 # (N*H, W*C), W*C == 128 (lane-dense)
    Nb, Hp, WpC = pad_ref.shape          # (N, H+2, (W+2)*C)
    H = Hp - 2
    C = (WpC - WC) // 2
    W = WC // C
    inv_cnt = 1.0 / float(NH * W)        # 1 / (N*H*W)
    eps = 1e-5

    # --- zero only the 1-pixel halo of the padded scratch --------------------
    zrow = jnp.zeros((Nb, 1, WpC), pad_ref.dtype)
    pad_ref[:, 0:1, :] = zrow
    pad_ref[:, Hp - 1:Hp, :] = zrow
    zcol = jnp.zeros((Nb, Hp, C), pad_ref.dtype)
    pad_ref[:, :, 0:C] = zcol
    pad_ref[:, :, WpC - C:WpC] = zcol

    def fill_interior(act_f32):
        # (N*H, W*C) activations -> interior of the padded buffer.
        pad_ref[:, 1:H + 1, C:C + WC] = act_f32.reshape(Nb, H, WC)

    def conv3x3(m_ref):
        # 3 MXU matmuls (one per kernel row); bf16 operands, f32 accumulation.
        # Output is already lane-dense (N*H, W*C).
        acc = jnp.zeros((NH, WC), jnp.float32)
        for dy in range(3):
            rows = pad_ref[:, dy:dy + H, :].reshape(NH, WpC).astype(jnp.bfloat16)
            acc = acc + jnp.dot(rows, m_ref[dy],
                                preferred_element_type=jnp.float32)
        return acc

    def batchnorm_train(y, g_ref, be_ref):
        # Single-pass per-channel stats: sublane reduce, then fold the W
        # lane-groups with cyclic lane rolls (XLU).  The fold leaves the
        # per-channel sums broadcast over the (w, c) lane pattern -> no
        # relayout needed.  var = E[y^2] - E[y]^2 in f32.
        s = jnp.sum(y, axis=0, keepdims=True)          # (1, W*C)
        sq = jnp.sum(y * y, axis=0, keepdims=True)     # (1, W*C)
        st = jnp.concatenate([s, sq], axis=0)          # (2, W*C)
        sh = C
        while sh < WC:                                  # log2(W) folds
            st = st + pltpu.roll(st, shift=sh, axis=1)
            sh *= 2
        mean = st[0:1] * inv_cnt
        var = st[1:2] * inv_cnt - mean * mean          # biased (training) var
        scale = jax.lax.rsqrt(var + eps) * g_ref[...]  # rsqrt -> EUP
        return (y - mean) * scale + be_ref[...]

    x = x_ref[...]                                     # (N*H, W*C) f32

    # conv1 -> BN1 -> PReLU  (conv bias omitted: cancels in training-mode BN)
    fill_interior(x)
    h = batchnorm_train(conv3x3(m1_ref), g1_ref, be1_ref)
    alpha = alpha_ref[0]                               # SMEM scalar
    h = jnp.where(h > 0, h, alpha * h)

    # conv2 -> BN2 (halo of the scratch is still zero)
    fill_interior(h)
    h = batchnorm_train(conv3x3(m2_ref), g2_ref, be2_ref)

    # residual add; full-width unmasked 128-lane store
    out_ref[...] = (x + h).astype(out_ref.dtype)


def toeplitz_conv_weights(w_hwio, W):
    """Expand HWIO 3x3 weights into per-dy block-Toeplitz matmul operands.

    Returns m with shape (kh, (W+kw-1)*Cin, W*Cout) such that, for a padded
    row laid out with lane index wp*Cin + ci, `padded_row @ m[dy]` yields the
    conv-output row with lane index w*Cout + co (summed over dy).
    """
    kh, kw, Ci, Co = w_hwio.shape
    Wp = W + kw - 1
    sel = np.zeros((kw, Wp, W), np.float32)
    for dx in range(kw):
        for w in range(W):
            sel[dx, dx + w, w] = 1.0
    m = jnp.einsum("yxio,xpw->ypiwo", w_hwio, jnp.asarray(sel))
    return m.reshape(kh, Wp * Ci, W * Co)


def residual_block_a(x_nchw, params):
    N, C, H, W = x_nchw.shape
    assert W * C == 128 and W & (W - 1) == 0, (
        "demo kernel assumes a lane-dense W*C == 128 layout with W a power of 2")
    x = jnp.transpose(x_nchw, (0, 2, 3, 1))            # NCHW -> NHWC
    x2d = x.reshape(N * H, W * C)                      # lane-dense activations

    # Trace-time prep: block-Toeplitz conv operands in bf16, BN params tiled
    # to the lane-dense (w, c) pattern, PReLU alpha as an SMEM scalar.
    m1 = toeplitz_conv_weights(params["w1"], W).astype(jnp.bfloat16)
    m2 = toeplitz_conv_weights(params["w2"], W).astype(jnp.bfloat16)
    g1 = jnp.tile(params["g1"], (1, W))
    be1 = jnp.tile(params["be1"], (1, W))
    g2 = jnp.tile(params["g2"], (1, W))
    be2 = jnp.tile(params["be2"], (1, W))
    alpha = params["alpha"].reshape(-1)[:1]
    # Conv biases are intentionally not passed: training-mode BN cancels them.

    vmem = pl.BlockSpec(memory_space=pltpu.MemorySpace.VMEM)
    smem = pl.BlockSpec(memory_space=pltpu.MemorySpace.SMEM)
    out2d = pl.pallas_call(
        res_block_kernel,
        out_shape=jax.ShapeDtypeStruct((N * H, W * C), x.dtype),
        in_specs=[vmem, vmem, vmem, vmem, vmem, vmem, vmem, smem],
        out_specs=vmem,
        scratch_shapes=[pltpu.VMEM((N, H + 2, (W + 2) * C), jnp.float32)],
    )(x2d, m1, m2, g1, be1, g2, be2, alpha)

    out = out2d.reshape(N, H, W, C)
    return jnp.transpose(out, (0, 3, 1, 2))            # NHWC -> NCHW


def reference(x_nchw, p):
    # Pure-JAX reference: f32 BN/PReLU/residual; conv operands quantized to
    # bf16 (mirroring the kernel's MXU precision) with f32 accumulation.
    x = jnp.transpose(x_nchw, (0, 2, 3, 1))

    def conv(h, w, b):
        y = jax.lax.conv_general_dilated(
            h.astype(jnp.bfloat16), w.astype(jnp.bfloat16),
            window_strides=(1, 1), padding="SAME",
            dimension_numbers=("NHWC", "HWIO", "NHWC"),
            preferred_element_type=jnp.float32)
        return y + b.reshape(1, 1, 1, -1)              # bias kept here; it
                                                       # cancels inside BN.

    def bn(y, g, be):
        mean = jnp.mean(y, axis=(0, 1, 2), keepdims=True)
        var = jnp.mean((y - mean) ** 2, axis=(0, 1, 2), keepdims=True)
        return ((y - mean) / jnp.sqrt(var + 1e-5)
                * g.reshape(1, 1, 1, -1) + be.reshape(1, 1, 1, -1))

    h = bn(conv(x, p["w1"], p["b1"]), p["g1"], p["be1"])
    a = p["alpha"].reshape(())
    h = jnp.where(h > 0, h, a * h)
    h = bn(conv(h, p["w2"], p["b2"]), p["g2"], p["be2"])
    return jnp.transpose(x + h, (0, 3, 1, 2))


def init_params(key, C, k=3):
    ks = jax.random.split(key, 8)
    return {
        # HWIO conv weights (== PyTorch weight.permute(2, 3, 1, 0))
        "w1": 0.1 * jax.random.normal(ks[0], (k, k, C, C), jnp.float32),
        "b1": 0.05 * jax.random.normal(ks[1], (1, C), jnp.float32),
        "g1": 1.0 + 0.1 * jax.random.normal(ks[2], (1, C), jnp.float32),
        "be1": 0.05 * jax.random.normal(ks[3], (1, C), jnp.float32),
        "alpha": jnp.full((1, 1), 0.25, jnp.float32),   # PReLU default init
        "w2": 0.1 * jax.random.normal(ks[4], (k, k, C, C), jnp.float32),
        "b2": 0.05 * jax.random.normal(ks[5], (1, C), jnp.float32),
        "g2": 1.0 + 0.1 * jax.random.normal(ks[6], (1, C), jnp.float32),
        "be2": 0.05 * jax.random.normal(ks[7], (1, C), jnp.float32),
    }


if __name__ == "__main__":
    key = jax.random.PRNGKey(0)
    k_x, k_p = jax.random.split(key)

    N, C, H, W = 2, 8, 16, 16            # in_features=8, kernel=3; W*C = 128
    x = jax.random.normal(k_x, (N, C, H, W), jnp.float32)   # PyTorch NCHW input
    params = init_params(k_p, C)

    out = jax.block_until_ready(residual_block_a(x, params))
    ref = reference(x, params)

    assert out.shape == (N, C, H, W)
    # Tolerance covers bf16 MXU operand rounding (accumulation-order noise and
    # the occasional 1-ulp re-quantization difference between the two conv
    # implementations); structural errors would be orders of magnitude larger.
    assert jnp.allclose(out, ref, rtol=1e-2, atol=1e-2), "mismatch vs JAX reference"

    print("KERNEL_OK")
</pallas_src>

<mosaic_0001>
module attributes {stable_mosaic.version = 11 : i64} {
  func.func @res_block_kernel(%arg0: memref<32x128xf32, #tpu.memory_space<vmem>>, %arg1: memref<3x144x128xbf16, #tpu.memory_space<vmem>>, %arg2: memref<3x144x128xbf16, #tpu.memory_space<vmem>>, %arg3: memref<1x128xf32, #tpu.memory_space<vmem>>, %arg4: memref<1x128xf32, #tpu.memory_space<vmem>>, %arg5: memref<1x128xf32, #tpu.memory_space<vmem>>, %arg6: memref<1x128xf32, #tpu.memory_space<vmem>>, %arg7: memref<1xf32, #tpu.memory_space<smem>>, %arg8: memref<32x128xf32, #tpu.memory_space<vmem>>, %arg9: memref<2x18x144xf32, #tpu.memory_space<vmem>>) attributes {dimension_semantics = [], scalar_prefetch = 0 : i64, scratch_operands = 1 : i64, tpu.core_type = #tpu.core_type<tc>} {
    %cst = arith.constant 0.000000e+00 : f32
    %0 = vector.broadcast %cst : f32 to vector<2x1x144xf32>
    %c0 = arith.constant 0 : index
    %c0_0 = arith.constant 0 : index
    %c0_1 = arith.constant 0 : index
    %1 = vector.load %arg9[%c0, %c0_0, %c0_1] : memref<2x18x144xf32, #tpu.memory_space<vmem>>, vector<2x1x144xf32>
    tpu.vector_store %arg9[%c0, %c0_0, %c0_1], %0 {strides = array<i32>} : memref<2x18x144xf32, #tpu.memory_space<vmem>>, vector<2x1x144xf32>,
    %c0_2 = arith.constant 0 : index
    %c17 = arith.constant 17 : index
    %c0_3 = arith.constant 0 : index
    %2 = vector.load %arg9[%c0_2, %c17, %c0_3] : memref<2x18x144xf32, #tpu.memory_space<vmem>>, vector<2x1x144xf32>
    tpu.vector_store %arg9[%c0_2, %c17, %c0_3], %0 {strides = array<i32>} : memref<2x18x144xf32, #tpu.memory_space<vmem>>, vector<2x1x144xf32>,
    %cst_4 = arith.constant 0.000000e+00 : f32
    %3 = vector.broadcast %cst_4 : f32 to vector<2x18x8xf32>
    %c0_5 = arith.constant 0 : index
    %c0_6 = arith.constant 0 : index
    %c0_7 = arith.constant 0 : index
    %4 = vector.load %arg9[%c0_5, %c0_6, %c0_7] : memref<2x18x144xf32, #tpu.memory_space<vmem>>, vector<2x18x8xf32>
    tpu.vector_store %arg9[%c0_5, %c0_6, %c0_7], %3 {strides = array<i32>} : memref<2x18x144xf32, #tpu.memory_space<vmem>>, vector<2x18x8xf32>,
    %c0_8 = arith.constant 0 : index
    %c0_9 = arith.constant 0 : index
    %c136 = arith.constant 136 : index
    %5 = vector.load %arg9[%c0_8, %c0_9, %c136] : memref<2x18x144xf32, #tpu.memory_space<vmem>>, vector<2x18x8xf32>
    tpu.vector_store %arg9[%c0_8, %c0_9, %c136], %3 {strides = array<i32>} : memref<2x18x144xf32, #tpu.memory_space<vmem>>, vector<2x18x8xf32>,
    %c0_10 = arith.constant 0 : index
    %c0_11 = arith.constant 0 : index
    %6 = vector.load %arg0[%c0_10, %c0_11] : memref<32x128xf32, #tpu.memory_space<vmem>>, vector<32x128xf32>
    %7 = vector.shape_cast %6 : vector<32x128xf32> to vector<2x16x128xf32>
    %c0_12 = arith.constant 0 : index
    %c1 = arith.constant 1 : index
    %c8 = arith.constant 8 : index
    %8 = vector.load %arg9[%c0_12, %c1, %c8] : memref<2x18x144xf32, #tpu.memory_space<vmem>>, vector<2x16x128xf32>
    tpu.vector_store %arg9[%c0_12, %c1, %c8], %7 {strides = array<i32>} : memref<2x18x144xf32, #tpu.memory_space<vmem>>, vector<2x16x128xf32>,
    %cst_13 = arith.constant 0.000000e+00 : f32
    %9 = vector.broadcast %cst_13 : f32 to vector<32x128xf32>
    %c0_14 = arith.constant 0 : index
    %c0_15 = arith.constant 0 : index
    %c0_16 = arith.constant 0 : index
    %10 = vector.load %arg9[%c0_14, %c0_15, %c0_16] : memref<2x18x144xf32, #tpu.memory_space<vmem>>, vector<2x16x144xf32>
    %11 = vector.shape_cast %10 : vector<2x16x144xf32> to vector<32x144xf32>
    %12 = arith.truncf %11 : vector<32x144xf32> to vector<32x144xbf16>
    %c0_17 = arith.constant 0 : index
    %c0_18 = arith.constant 0 : index
    %c0_19 = arith.constant 0 : index
    %13 = vector.load %arg1[%c0_17, %c0_18, %c0_19] : memref<3x144x128xbf16, #tpu.memory_space<vmem>>, vector<1x144x128xbf16>
    %14 = vector.shape_cast %13 : vector<1x144x128xbf16> to vector<144x128xbf16>
    %cst_20 = arith.constant dense<0.000000e+00> : vector<32x128xf32>
    %15 = tpu.matmul %12, %14, %cst_20 {dimension_numbers = #tpu.dot_dimension_numbers<[1], [0], [0], [1], [0, 0, 1, 1], [], []>} : vector<32x144xbf16>, vector<144x128xbf16>, vector<32x128xf32> -> vector<32x128xf32>
    %16 = arith.addf %9, %15 : vector<32x128xf32>
    %c0_21 = arith.constant 0 : index
    %c1_22 = arith.constant 1 : index
    %c0_23 = arith.constant 0 : index
    %17 = vector.load %arg9[%c0_21, %c1_22, %c0_23] : memref<2x18x144xf32, #tpu.memory_space<vmem>>, vector<2x16x144xf32>
    %18 = vector.shape_cast %17 : vector<2x16x144xf32> to vector<32x144xf32>
    %19 = arith.truncf %18 : vector<32x144xf32> to vector<32x144xbf16>
    %c1_24 = arith.constant 1 : index
    %c0_25 = arith.constant 0 : index
    %c0_26 = arith.constant 0 : index
    %20 = vector.load %arg1[%c1_24, %c0_25, %c0_26] : memref<3x144x128xbf16, #tpu.memory_space<vmem>>, vector<1x144x128xbf16>
    %21 = vector.shape_cast %20 : vector<1x144x128xbf16> to vector<144x128xbf16>
    %cst_27 = arith.constant dense<0.000000e+00> : vector<32x128xf32>
    %22 = tpu.matmul %19, %21, %cst_27 {dimension_numbers = #tpu.dot_dimension_numbers<[1], [0], [0], [1], [0, 0, 1, 1], [], []>} : vector<32x144xbf16>, vector<144x128xbf16>, vector<32x128xf32> -> vector<32x128xf32>
    %23 = arith.addf %16, %22 : vector<32x128xf32>
    %c0_28 = arith.constant 0 : index
    %c2 = arith.constant 2 : index
    %c0_29 = arith.constant 0 : index
    %24 = vector.load %arg9[%c0_28, %c2, %c0_29] : memref<2x18x144xf32, #tpu.memory_space<vmem>>, vector<2x16x144xf32>
    %25 = vector.shape_cast %24 : vector<2x16x144xf32> to vector<32x144xf32>
    %26 = arith.truncf %25 : vector<32x144xf32> to vector<32x144xbf16>
    %c2_30 = arith.constant 2 : index
    %c0_31 = arith.constant 0 : index
    %c0_32 = arith.constant 0 : index
    %27 = vector.load %arg1[%c2_30, %c0_31, %c0_32] : memref<3x144x128xbf16, #tpu.memory_space<vmem>>, vector<1x144x128xbf16>
    %28 = vector.shape_cast %27 : vector<1x144x128xbf16> to vector<144x128xbf16>
    %cst_33 = arith.constant dense<0.000000e+00> : vector<32x128xf32>
    %29 = tpu.matmul %26, %28, %cst_33 {dimension_numbers = #tpu.dot_dimension_numbers<[1], [0], [0], [1], [0, 0, 1, 1], [], []>} : vector<32x144xbf16>, vector<144x128xbf16>, vector<32x128xf32> -> vector<32x128xf32>
    %30 = arith.addf %23, %29 : vector<32x128xf32>
    %cst_34 = arith.constant dense<0.000000e+00> : vector<128xf32>
    %31 = vector.multi_reduction <add>, %30, %cst_34 [0] : vector<32x128xf32> to vector<128xf32>
    %32 = vector.shape_cast %31 : vector<128xf32> to vector<1x128xf32>
    %33 = arith.mulf %30, %30 : vector<32x128xf32>
    %cst_35 = arith.constant dense<0.000000e+00> : vector<128xf32>
    %34 = vector.multi_reduction <add>, %33, %cst_35 [0] : vector<32x128xf32> to vector<128xf32>
    %35 = vector.shape_cast %34 : vector<128xf32> to vector<1x128xf32>
    %36 = tpu.concatenate %32, %35 in 0 : vector<1x128xf32>, vector<1x128xf32> -> vector<2x128xf32>
    %c8_i32 = arith.constant 8 : i32
    %37 = tpu.dynamic_rotate %36 by %c8_i32 dim 1 : vector<2x128xf32>, i32 -> vector<2x128xf32>
    %38 = arith.addf %36, %37 : vector<2x128xf32>
    %c16_i32 = arith.constant 16 : i32
    %39 = tpu.dynamic_rotate %38 by %c16_i32 dim 1 : vector<2x128xf32>, i32 -> vector<2x128xf32>
    %40 = arith.addf %38, %39 : vector<2x128xf32>
    %c32_i32 = arith.constant 32 : i32
    %41 = tpu.dynamic_rotate %40 by %c32_i32 dim 1 : vector<2x128xf32>, i32 -> vector<2x128xf32>
    %42 = arith.addf %40, %41 : vector<2x128xf32>
    %c64_i32 = arith.constant 64 : i32
    %43 = tpu.dynamic_rotate %42 by %c64_i32 dim 1 : vector<2x128xf32>, i32 -> vector<2x128xf32>
    %44 = arith.addf %42, %43 : vector<2x128xf32>
    %45 = vector.extract_strided_slice %44 {offsets = [0, 0], sizes = [1, 128], strides = [1, 1]} : vector<2x128xf32> to vector<1x128xf32>
    %cst_36 = arith.constant 0.001953125 : f32
    %46 = vector.broadcast %cst_36 : f32 to vector<1x128xf32>
    %47 = arith.mulf %45, %46 : vector<1x128xf32>
    %48 = vector.extract_strided_slice %44 {offsets = [1, 0], sizes = [1, 128], strides = [1, 1]} : vector<2x128xf32> to vector<1x128xf32>
    %cst_37 = arith.constant 0.001953125 : f32
    %49 = vector.broadcast %cst_37 : f32 to vector<1x128xf32>
    %50 = arith.mulf %48, %49 : vector<1x128xf32>
    %51 = arith.mulf %47, %47 : vector<1x128xf32>
    %52 = arith.subf %50, %51 : vector<1x128xf32>
    %cst_38 = arith.constant 9.99999974E-6 : f32
    %53 = vector.broadcast %cst_38 : f32 to vector<1x128xf32>
    %54 = arith.addf %52, %53 : vector<1x128xf32>
    %55 = math.rsqrt %54 : vector<1x128xf32>
    %c0_39 = arith.constant 0 : index
    %c0_40 = arith.constant 0 : index
    %56 = vector.load %arg3[%c0_39, %c0_40] : memref<1x128xf32, #tpu.memory_space<vmem>>, vector<1x128xf32>
    %57 = arith.mulf %55, %56 : vector<1x128xf32>
    %58 = vector.broadcast %47 : vector<1x128xf32> to vector<32x128xf32>
    %59 = arith.subf %30, %58 : vector<32x128xf32>
    %60 = vector.broadcast %57 : vector<1x128xf32> to vector<32x128xf32>
    %61 = arith.mulf %59, %60 : vector<32x128xf32>
    %c0_41 = arith.constant 0 : index
    %c0_42 = arith.constant 0 : index
    %62 = vector.load %arg4[%c0_41, %c0_42] : memref<1x128xf32, #tpu.memory_space<vmem>>, vector<1x128xf32>
    %63 = vector.broadcast %62 : vector<1x128xf32> to vector<32x128xf32>
    %64 = arith.addf %61, %63 : vector<32x128xf32>
    %c0_43 = arith.constant 0 : index
    %65 = memref.load %arg7[%c0_43] : memref<1xf32, #tpu.memory_space<smem>>
    %cst_44 = arith.constant 0.000000e+00 : f32
    %66 = vector.broadcast %cst_44 : f32 to vector<32x128xf32>
    %67 = arith.cmpf ogt, %64, %66 : vector<32x128xf32>
    %68 = vector.broadcast %65 : f32 to vector<32x128xf32>
    %69 = arith.mulf %68, %64 : vector<32x128xf32>
    %70 = arith.select %67, %64, %69 : vector<32x128xi1>, vector<32x128xf32>
    %71 = vector.shape_cast %70 : vector<32x128xf32> to vector<2x16x128xf32>
    %c0_45 = arith.constant 0 : index
    %c1_46 = arith.constant 1 : index
    %c8_47 = arith.constant 8 : index
    %72 = vector.load %arg9[%c0_45, %c1_46, %c8_47] : memref<2x18x144xf32, #tpu.memory_space<vmem>>, vector<2x16x128xf32>
    tpu.vector_store %arg9[%c0_45, %c1_46, %c8_47], %71 {strides = array<i32>} : memref<2x18x144xf32, #tpu.memory_space<vmem>>, vector<2x16x128xf32>,
    %cst_48 = arith.constant 0.000000e+00 : f32
    %73 = vector.broadcast %cst_48 : f32 to vector<32x128xf32>
    %c0_49 = arith.constant 0 : index
    %c0_50 = arith.constant 0 : index
    %c0_51 = arith.constant 0 : index
    %74 = vector.load %arg9[%c0_49, %c0_50, %c0_51] : memref<2x18x144xf32, #tpu.memory_space<vmem>>, vector<2x16x144xf32>
    %75 = vector.shape_cast %74 : vector<2x16x144xf32> to vector<32x144xf32>
    %76 = arith.truncf %75 : vector<32x144xf32> to vector<32x144xbf16>
    %c0_52 = arith.constant 0 : index
    %c0_53 = arith.constant 0 : index
    %c0_54 = arith.constant 0 : index
    %77 = vector.load %arg2[%c0_52, %c0_53, %c0_54] : memref<3x144x128xbf16, #tpu.memory_space<vmem>>, vector<1x144x128xbf16>
    %78 = vector.shape_cast %77 : vector<1x144x128xbf16> to vector<144x128xbf16>
    %cst_55 = arith.constant dense<0.000000e+00> : vector<32x128xf32>
    %79 = tpu.matmul %76, %78, %cst_55 {dimension_numbers = #tpu.dot_dimension_numbers<[1], [0], [0], [1], [0, 0, 1, 1], [], []>} : vector<32x144xbf16>, vector<144x128xbf16>, vector<32x128xf32> -> vector<32x128xf32>
    %80 = arith.addf %73, %79 : vector<32x128xf32>
    %c0_56 = arith.constant 0 : index
    %c1_57 = arith.constant 1 : index
    %c0_58 = arith.constant 0 : index
    %81 = vector.load %arg9[%c0_56, %c1_57, %c0_58] : memref<2x18x144xf32, #tpu.memory_space<vmem>>, vector<2x16x144xf32>
    %82 = vector.shape_cast %81 : vector<2x16x144xf32> to vector<32x144xf32>
    %83 = arith.truncf %82 : vector<32x144xf32> to vector<32x144xbf16>
    %c1_59 = arith.constant 1 : index
    %c0_60 = arith.constant 0 : index
    %c0_61 = arith.constant 0 : index
    %84 = vector.load %arg2[%c1_59, %c0_60, %c0_61] : memref<3x144x128xbf16, #tpu.memory_space<vmem>>, vector<1x144x128xbf16>
    %85 = vector.shape_cast %84 : vector<1x144x128xbf16> to vector<144x128xbf16>
    %cst_62 = arith.constant dense<0.000000e+00> : vector<32x128xf32>
    %86 = tpu.matmul %83, %85, %cst_62 {dimension_numbers = #tpu.dot_dimension_numbers<[1], [0], [0], [1], [0, 0, 1, 1], [], []>} : vector<32x144xbf16>, vector<144x128xbf16>, vector<32x128xf32> -> vector<32x128xf32>
    %87 = arith.addf %80, %86 : vector<32x128xf32>
    %c0_63 = arith.constant 0 : index
    %c2_64 = arith.constant 2 : index
    %c0_65 = arith.constant 0 : index
    %88 = vector.load %arg9[%c0_63, %c2_64, %c0_65] : memref<2x18x144xf32, #tpu.memory_space<vmem>>, vector<2x16x144xf32>
    %89 = vector.shape_cast %88 : vector<2x16x144xf32> to vector<32x144xf32>
    %90 = arith.truncf %89 : vector<32x144xf32> to vector<32x144xbf16>
    %c2_66 = arith.constant 2 : index
    %c0_67 = arith.constant 0 : index
    %c0_68 = arith.constant 0 : index
    %91 = vector.load %arg2[%c2_66, %c0_67, %c0_68] : memref<3x144x128xbf16, #tpu.memory_space<vmem>>, vector<1x144x128xbf16>
    %92 = vector.shape_cast %91 : vector<1x144x128xbf16> to vector<144x128xbf16>
    %cst_69 = arith.constant dense<0.000000e+00> : vector<32x128xf32>
    %93 = tpu.matmul %90, %92, %cst_69 {dimension_numbers = #tpu.dot_dimension_numbers<[1], [0], [0], [1], [0, 0, 1, 1], [], []>} : vector<32x144xbf16>, vector<144x128xbf16>, vector<32x128xf32> -> vector<32x128xf32>
    %94 = arith.addf %87, %93 : vector<32x128xf32>
    %cst_70 = arith.constant dense<0.000000e+00> : vector<128xf32>
    %95 = vector.multi_reduction <add>, %94, %cst_70 [0] : vector<32x128xf32> to vector<128xf32>
    %96 = vector.shape_cast %95 : vector<128xf32> to vector<1x128xf32>
    %97 = arith.mulf %94, %94 : vector<32x128xf32>
    %cst_71 = arith.constant dense<0.000000e+00> : vector<128xf32>
    %98 = vector.multi_reduction <add>, %97, %cst_71 [0] : vector<32x128xf32> to vector<128xf32>
    %99 = vector.shape_cast %98 : vector<128xf32> to vector<1x128xf32>
    %100 = tpu.concatenate %96, %99 in 0 : vector<1x128xf32>, vector<1x128xf32> -> vector<2x128xf32>
    %c8_i32_72 = arith.constant 8 : i32
    %101 = tpu.dynamic_rotate %100 by %c8_i32_72 dim 1 : vector<2x128xf32>, i32 -> vector<2x128xf32>
    %102 = arith.addf %100, %101 : vector<2x128xf32>
    %c16_i32_73 = arith.constant 16 : i32
    %103 = tpu.dynamic_rotate %102 by %c16_i32_73 dim 1 : vector<2x128xf32>, i32 -> vector<2x128xf32>
    %104 = arith.addf %102, %103 : vector<2x128xf32>
    %c32_i32_74 = arith.constant 32 : i32
    %105 = tpu.dynamic_rotate %104 by %c32_i32_74 dim 1 : vector<2x128xf32>, i32 -> vector<2x128xf32>
    %106 = arith.addf %104, %105 : vector<2x128xf32>
    %c64_i32_75 = arith.constant 64 : i32
    %107 = tpu.dynamic_rotate %106 by %c64_i32_75 dim 1 : vector<2x128xf32>, i32 -> vector<2x128xf32>
    %108 = arith.addf %106, %107 : vector<2x128xf32>
    %109 = vector.extract_strided_slice %108 {offsets = [0, 0], sizes = [1, 128], strides = [1, 1]} : vector<2x128xf32> to vector<1x128xf32>
    %cst_76 = arith.constant 0.001953125 : f32
    %110 = vector.broadcast %cst_76 : f32 to vector<1x128xf32>
    %111 = arith.mulf %109, %110 : vector<1x128xf32>
    %112 = vector.extract_strided_slice %108 {offsets = [1, 0], sizes = [1, 128], strides = [1, 1]} : vector<2x128xf32> to vector<1x128xf32>
    %cst_77 = arith.constant 0.001953125 : f32
    %113 = vector.broadcast %cst_77 : f32 to vector<1x128xf32>
    %114 = arith.mulf %112, %113 : vector<1x128xf32>
    %115 = arith.mulf %111, %111 : vector<1x128xf32>
    %116 = arith.subf %114, %115 : vector<1x128xf32>
    %cst_78 = arith.constant 9.99999974E-6 : f32
    %117 = vector.broadcast %cst_78 : f32 to vector<1x128xf32>
    %118 = arith.addf %116, %117 : vector<1x128xf32>
    %119 = math.rsqrt %118 : vector<1x128xf32>
    %c0_79 = arith.constant 0 : index
    %c0_80 = arith.constant 0 : index
    %120 = vector.load %arg5[%c0_79, %c0_80] : memref<1x128xf32, #tpu.memory_space<vmem>>, vector<1x128xf32>
    %121 = arith.mulf %119, %120 : vector<1x128xf32>
    %122 = vector.broadcast %111 : vector<1x128xf32> to vector<32x128xf32>
    %123 = arith.subf %94, %122 : vector<32x128xf32>
    %124 = vector.broadcast %121 : vector<1x128xf32> to vector<32x128xf32>
    %125 = arith.mulf %123, %124 : vector<32x128xf32>
    %c0_81 = arith.constant 0 : index
    %c0_82 = arith.constant 0 : index
    %126 = vector.load %arg6[%c0_81, %c0_82] : memref<1x128xf32, #tpu.memory_space<vmem>>, vector<1x128xf32>
    %127 = vector.broadcast %126 : vector<1x128xf32> to vector<32x128xf32>
    %128 = arith.addf %125, %127 : vector<32x128xf32>
    %129 = arith.addf %6, %128 : vector<32x128xf32>
    %c0_83 = arith.constant 0 : index
    %c0_84 = arith.constant 0 : index
    %130 = vector.load %arg8[%c0_83, %c0_84] : memref<32x128xf32, #tpu.memory_space<vmem>>, vector<32x128xf32>
    tpu.vector_store %arg8[%c0_83, %c0_84], %129 {strides = array<i32>} : memref<32x128xf32, #tpu.memory_space<vmem>>, vector<32x128xf32>,
    return
  }
}

</mosaic_0001>

<llo_original>
// kernel: tpu_custom_call.1
$region0: #{tpu_custom_call.1}
  #allocation0 [shape = 'u32[]', space=smem, size = 0x4, offset = 0x4, fixed_abs, tag = 'smem constant byte address 0x4 - core index']
  #allocation1 [shape = 'u32[144,128]{1,0:T(1,128)}', space=vmem, size = 0x12000, scoped, tag = 'internal scratch']
  #allocation2 [shape = 'f32[2,18,144]{2,1,0:T(8,128)}', space=vmem, size = 0xc000, scoped, tag = 'scratch operand']
  #allocation3 [shape = 'f32[1]{0:T(128)S(6)}', space=smem, size = 0x200, scoped, tag = 'scoped memory for tpu_custom_call.1']
  %s0 = inlined_call_operand.hbm [shape: f32[32,128], index: 0, kind: input, shape index: {}]
  %s1 = inlined_call_operand.hbm [shape: bf16[3,144,128], index: 1, kind: input, shape index: {}]
  %s2 = inlined_call_operand.hbm [shape: bf16[3,144,128], index: 2, kind: input, shape index: {}]
  %s3 = inlined_call_operand.vmem [shape: f32[1,128], index: 3, kind: input, shape index: {}]
  %s4 = inlined_call_operand.vmem [shape: f32[1,128], index: 4, kind: input, shape index: {}]
  %s5 = inlined_call_operand.vmem [shape: f32[1,128], index: 5, kind: input, shape index: {}]
  %s6 = inlined_call_operand.vmem [shape: f32[1,128], index: 6, kind: input, shape index: {}]
  %s7 = inlined_call_operand.<no memory space> [shape: f32[1], index: 7, kind: input, shape index: {}]
  %s8 = inlined_call_operand.hbm [shape: f32[32,128], index: 8, kind: output, shape index: {}]
  %s9 = sld [smem:[#allocation0]]
  $region54: #{tpu_custom_call.1} parent=0
    _
  %s11 = ssub.s32 1, %s9
  %s12 = scalar_select 0, %s11, %s9
  %13 = sst [smem:[#allocation3]] %s7
  $region1: #{tpu_custom_call.1} parent=0
    #allocation4 [shape = 'u8[16384]{0}', space=vmem, size = 0x4000, scoped, tag = 'input window, operand 0, single buffered']
    #allocation5 [shape = 's32[1]{0}', space=sflag, size = 0x4, scoped, tag = 'scoped memory for tpu_custom_call.1']
    #allocation6 [shape = 's32[1]{0}', space=sflag, size = 0x4, scoped, tag = 'scoped memory for tpu_custom_call.1']
    #allocation7 [shape = 'u8[110592]{0}', space=vmem, size = 0x1b000, scoped, tag = 'input window, operand 1, single buffered']
    #allocation8 [shape = 's32[1]{0}', space=sflag, size = 0x4, scoped, tag = 'scoped memory for tpu_custom_call.1']
    #allocation9 [shape = 'u8[110592]{0}', space=vmem, size = 0x1b000, scoped, tag = 'input window, operand 2, single buffered']
    #allocation10 [shape = 'u8[16384]{0}', space=vmem, size = 0x4000, scoped, tag = 'output window, operand 0, single buffered']
    %14 = vsyncpa [#allocation5], 0
    %15 = vsyncpa [#allocation8], 0
    %16 = vsyncpa [#allocation6], 0
    // Predicated region
    $region2: #{tpu_custom_call.1} parent=1 // pred_check
      _
    $region3: #{tpu_custom_call.1} parent=1 // pred_check_branch
      %18 = sbr.rel (0) target = $region5
    $region4: #{tpu_custom_call.1} parent=1 // pred_region
      %s20 = ssub.s32 512, 512
      %21 = vsyncadd [#allocation5], %s20
      %s22 = sshll.u32 [#allocation4], 4
      %s23 = int_to_ptr.vmem [resolvable:$true] %s22
      %28 = dma.hbm_to_vmem [thread:$0]  %s0, 512, %s23, [#allocation5], 128, 128, 8
    $region5: #{tpu_custom_call.1} parent=1 // pred_fallthru
      _
    // Predicated region
    $region6: #{tpu_custom_call.1} parent=1 // pred_check
      _
    $region7: #{tpu_custom_call.1} parent=1 // pred_check_branch
      %30 = sbr.rel (0) target = $region9
    $region8: #{tpu_custom_call.1} parent=1 // pred_region
      %s32 = ssub.s32 3456, 3456
      %33 = vsyncadd [#allocation8], %s32
      %s34 = sshll.u32 [#allocation7], 4
      %s35 = int_to_ptr.vmem [resolvable:$true] %s34
      %40 = dma.hbm_to_vmem [thread:$0]  %s1, 3456, %s35, [#allocation8], 64, 64, 4
    $region9: #{tpu_custom_call.1} parent=1 // pred_fallthru
      _
    // Predicated region
    $region10: #{tpu_custom_call.1} parent=1 // pred_check
      _
    $region11: #{tpu_custom_call.1} parent=1 // pred_check_branch
      %42 = sbr.rel (0) target = $region13
    $region12: #{tpu_custom_call.1} parent=1 // pred_region
      %s44 = ssub.s32 3456, 3456
      %45 = vsyncadd [#allocation8], %s44
      %s46 = sshll.u32 [#allocation9], 4
      %s47 = int_to_ptr.vmem [resolvable:$true] %s46
      %52 = dma.hbm_to_vmem [thread:$0]  %s2, 3456, %s47, [#allocation8], 64, 64, 4
    $region13: #{tpu_custom_call.1} parent=1 // pred_fallthru
      _
    // Predicated region
    $region14: #{tpu_custom_call.1} parent=1 // pred_check
      _
    $region15: #{tpu_custom_call.1} parent=1 // pred_check_branch
      %54 = sbr.rel (0) target = $region17
    $region16: #{tpu_custom_call.1} parent=1 // pred_region
      _
    $region17: #{tpu_custom_call.1} parent=1 // pred_fallthru
      _
    // Predicated region
    $region18: #{tpu_custom_call.1} parent=1 // pred_check
      _
    $region19: #{tpu_custom_call.1} parent=1 // pred_check_branch
      %56 = sbr.rel (0) target = $region21
    $region20: #{tpu_custom_call.1} parent=1 // pred_region
      _
    $region21: #{tpu_custom_call.1} parent=1 // pred_fallthru
      _
    // Predicated region
    $region22: #{tpu_custom_call.1} parent=1 // pred_check
      _
    $region23: #{tpu_custom_call.1} parent=1 // pred_check_branch
      %58 = sbr.rel (0) target = $region25
    $region24: #{tpu_custom_call.1} parent=1 // pred_region
      _
    $region25: #{tpu_custom_call.1} parent=1 // pred_fallthru
      _
    // Predicated region
    $region26: #{tpu_custom_call.1} parent=1 // pred_check
      _
    $region27: #{tpu_custom_call.1} parent=1 // pred_check_branch
      %60 = sbr.rel (0) target = $region29
    $region28: #{tpu_custom_call.1} parent=1 // pred_region
      _
    $region29: #{tpu_custom_call.1} parent=1 // pred_fallthru
      _
    // Predicated region
    $region30: #{tpu_custom_call.1} parent=1 // pred_check
      _
    $region31: #{tpu_custom_call.1} parent=1 // pred_check_branch
      %62 = sbr.rel (0) target = $region33
    $region32: #{tpu_custom_call.1} parent=1 // pred_region
      _
    $region33: #{tpu_custom_call.1} parent=1 // pred_fallthru
      _
    // Predicated region
    $region34: #{tpu_custom_call.1} parent=1 // pred_check
      _
    $region35: #{tpu_custom_call.1} parent=1 // pred_check_branch
      %64 = sbr.rel (0) target = $region37
    $region36: #{tpu_custom_call.1} parent=1 // pred_region
      %65 = dma.done [#allocation5], 512
    $region37: #{tpu_custom_call.1} parent=1 // pred_fallthru
      _
    // Predicated region
    $region38: #{tpu_custom_call.1} parent=1 // pred_check
      _
    $region39: #{tpu_custom_call.1} parent=1 // pred_check_branch
      %67 = sbr.rel (0) target = $region41
    $region40: #{tpu_custom_call.1} parent=1 // pred_region
      %68 = dma.done [#allocation8], 3456
    $region41: #{tpu_custom_call.1} parent=1 // pred_fallthru
      _
    // Predicated region
    $region42: #{tpu_custom_call.1} parent=1 // pred_check
      _
    $region43: #{tpu_custom_call.1} parent=1 // pred_check_branch
      %70 = sbr.rel (0) target = $region45
    $region44: #{tpu_custom_call.1} parent=1 // pred_region
      %71 = dma.done [#allocation8], 3456
    $region45: #{tpu_custom_call.1} parent=1 // pred_fallthru
      _
    %v73 = vlaneseq
    %vm74 = vcmp.ge.s32.totalorder %v73, 0
    %vm75 = vcmp.lt.s32.totalorder %v73, 144
    %vm76 = vmand %vm74, %vm75
    %77 = vst.msk [vmem:[#allocation2] ss:$8 sm:$0x3] %vm76, 0.0
    %78 = vst.msk [vmem:[#allocation2] ss:$8 sm:$0x0] %vm76, 0.0
    %s79 = scalar_lea.vmem [#allocation2], 48
    %80 = vst.msk [vmem:[%s79] ss:$8 sm:$0x3] %vm76, 0.0
    %81 = vst.msk [vmem:[%s79] ss:$8 sm:$0x0] %vm76, 0.0
    %s82 = scalar_lea.vmem [#allocation2], 33
    %83 = vst.msk [vmem:[%s82] ss:$8 sm:$0x3] %vm76, 0.0
    %84 = vst.msk [vmem:[%s82] ss:$8 sm:$0x0] %vm76, 0.0
    %s85 = scalar_lea.vmem [#allocation2], 81
    %86 = vst.msk [vmem:[%s85] ss:$8 sm:$0x3] %vm76, 0.0
    %87 = vst.msk [vmem:[%s85] ss:$8 sm:$0x0] %vm76, 0.0
    %vm88 = vcmask 64512
    %89 = vst.msk [vmem:[#allocation2] sm:$0xff] %vm88, 0.0
    %90 = vst.msk [vmem:[#allocation2 + $0x10] sm:$0xff] %vm88, 0.0
    %vm91 = vcmask 58368
    %92 = vst.msk [vmem:[#allocation2 + $0x20] sm:$0x3] %vm91, 0.0
    %93 = vst.msk [vmem:[#allocation2 + $0x30] sm:$0xff] %vm88, 0.0
    %94 = vst.msk [vmem:[#allocation2 + $0x40] sm:$0xff] %vm88, 0.0
    %95 = vst.msk [vmem:[#allocation2 + $0x50] sm:$0x3] %vm91, 0.0
    %vm96 = vcmask 130112
    %97 = vst.msk [vmem:[#allocation2 + $0x8] sm:$0xff] %vm96, 0.0
    %98 = vst.msk [vmem:[#allocation2 + $0x18] sm:$0xff] %vm96, 0.0
    %vm99 = vcmask 123968
    %100 = vst.msk [vmem:[#allocation2 + $0x28] sm:$0x3] %vm99, 0.0
    %101 = vst.msk [vmem:[#allocation2 + $0x38] sm:$0xff] %vm96, 0.0
    %102 = vst.msk [vmem:[#allocation2 + $0x48] sm:$0xff] %vm96, 0.0
    %103 = vst.msk [vmem:[#allocation2 + $0x58] sm:$0x3] %vm99, 0.0
    %v104 = vld [vmem:[#allocation4] sm:$0xff]
    %v105 = vld [vmem:[#allocation4 + $0x8] sm:$0xff]
    %v106 = vld [vmem:[#allocation4 + $0x10] sm:$0xff]
    %v107 = vld [vmem:[#allocation4 + $0x18] sm:$0xff]
    %vm112 = vcmask 1040384
    %v113 = vrot.slane %v104, 7
    %v114 = vrot.slane %v105, 7
    %v115 = vsel %vm112, %v113, %v114
    %v116 = vrot.slane %v106, 7
    %v117 = vrot.slane %v107, 7
    %v118 = vsel %vm112, %v116, %v117
    %119 = vrot.lane.b32.xlu0 %v113, 8
    %v120 = vpop.permute.xlu0 %119
    %121 = vrot.lane.b32.xlu0 %v115, 8
    %v122 = vpop.permute.xlu0 %121
    %123 = vrot.lane.b32.xlu0 %v114, 8
    %v124 = vpop.permute.xlu0 %123
    %125 = vrot.lane.b32.xlu0 %v116, 8
    %v126 = vpop.permute.xlu0 %125
    %127 = vrot.lane.b32.xlu0 %v118, 8
    %v128 = vpop.permute.xlu0 %127
    %129 = vrot.lane.b32.xlu0 %v117, 8
    %v130 = vpop.permute.xlu0 %129
    %vm137 = vcmask 1047617
    %138 = vst.msk [vmem:[#allocation2] sm:$0xfe] %vm137, %v120
    %vm139 = vcmask 64513
    %140 = vst.msk [vmem:[#allocation2 + $0x8] sm:$0xfe] %vm139, %v120
    %vm141 = vcmask 1047616
    %142 = vst.msk [vmem:[#allocation2 + $0x10] sm:$0xff] %vm141, %v122
    %143 = vst.msk [vmem:[#allocation2 + $0x18] sm:$0xff] %vm88, %v122
    %vm144 = vcmask 1040448
    %145 = vst.msk [vmem:[#allocation2 + $0x20] sm:$0x1] %vm144, %v124
    %vm146 = vcmask 57344
    %147 = vst.msk [vmem:[#allocation2 + $0x28] sm:$0x1] %vm146, %v124
    %148 = vst.msk [vmem:[#allocation2 + $0x30] sm:$0xfe] %vm137, %v126
    %149 = vst.msk [vmem:[#allocation2 + $0x38] sm:$0xfe] %vm139, %v126
    %150 = vst.msk [vmem:[#allocation2 + $0x40] sm:$0xff] %vm141, %v128
    %151 = vst.msk [vmem:[#allocation2 + $0x48] sm:$0xff] %vm88, %v128
    %152 = vst.msk [vmem:[#allocation2 + $0x50] sm:$0x1] %vm144, %v130
    %153 = vst.msk [vmem:[#allocation2 + $0x58] sm:$0x1] %vm146, %v130
    %v154 = vld [vmem:[#allocation2] sm:$0xff]
    %v155 = vld [vmem:[#allocation2 + $0x8] sm:$0xff]
    %v156 = vld [vmem:[#allocation2 + $0x10] sm:$0xff]
    %v157 = vld [vmem:[#allocation2 + $0x18] sm:$0xff]
    %v158 = vld [vmem:[#allocation2 + $0x30] sm:$0xff]
    %v159 = vld [vmem:[#allocation2 + $0x38] sm:$0xff]
    %v160 = vld [vmem:[#allocation2 + $0x40] sm:$0xff]
    %v161 = vld [vmem:[#allocation2 + $0x48] sm:$0xff]
    %v162 = vpack.c.bf16 %v156, %v154
    %v163 = vpack.c.bf16 %v157, %v155
    %v164 = vpack.c.bf16 %v160, %v158
    %v165 = vpack.c.bf16 %v161, %v159
    %v166 = vld [vmem:[#allocation7] sm:$0xf]
    %v167 = vld [vmem:[#allocation7 + $0x4] sm:$0xf]
    %v168 = vld [vmem:[#allocation7 + $0x8] sm:$0xf]
    %v169 = vld [vmem:[#allocation7 + $0xc] sm:$0xf]
    %v170 = vld [vmem:[#allocation7 + $0x10] sm:$0xf]
    %v171 = vld [vmem:[#allocation7 + $0x14] sm:$0xf]
    %v172 = vld [vmem:[#allocation7 + $0x18] sm:$0xf]
    %v173 = vld [vmem:[#allocation7 + $0x1c] sm:$0xf]
    %v174 = vld [vmem:[#allocation7 + $0x20] sm:$0xf]
    %v175 = vld [vmem:[#allocation7 + $0x24] sm:$0xf]
    %v176 = vld [vmem:[#allocation7 + $0x28] sm:$0xf]
    %v177 = vld [vmem:[#allocation7 + $0x2c] sm:$0xf]
    %v178 = vld [vmem:[#allocation7 + $0x30] sm:$0xf]
    %v179 = vld [vmem:[#allocation7 + $0x34] sm:$0xf]
    %v180 = vld [vmem:[#allocation7 + $0x38] sm:$0xf]
    %v181 = vld [vmem:[#allocation7 + $0x3c] sm:$0xf]
    %v182 = vld [vmem:[#allocation7 + $0x40] sm:$0xf]
    %v183 = vld [vmem:[#allocation7 + $0x44] sm:$0xf]
    %v184 = vld [vmem:[#allocation2] sm:$0xfe]
    %v185 = vld [vmem:[#allocation2 + $0x8] sm:$0xfe]
    %v186 = vld [vmem:[#allocation2 + $0x20] sm:$0x1]
    %v187 = vld [vmem:[#allocation2 + $0x28] sm:$0x1]
    %v188 = vld [vmem:[#allocation2 + $0x30] sm:$0xfe]
    %v189 = vld [vmem:[#allocation2 + $0x38] sm:$0xfe]
    %v190 = vld [vmem:[#allocation2 + $0x50] sm:$0x1]
    %v191 = vld [vmem:[#allocation2 + $0x58] sm:$0x1]
    %vm204 = vcmask 1046528
    %v205 = vrot.slane %v184, 1
    %v206 = vrot.slane %v156, 1
    %v207 = vsel %vm204, %v205, %v206
    %v208 = vrot.slane %v185, 1
    %v209 = vrot.slane %v157, 1
    %v210 = vsel %vm204, %v208, %v209
    %v211 = vrot.slane %v186, 1
    %v212 = vsel %vm204, %v206, %v211
    %v213 = vrot.slane %v187, 1
    %v214 = vsel %vm204, %v209, %v213
    %v215 = vrot.slane %v188, 1
    %v216 = vrot.slane %v160, 1
    %v217 = vsel %vm204, %v215, %v216
    %v218 = vrot.slane %v189, 1
    %v219 = vrot.slane %v161, 1
    %v220 = vsel %vm204, %v218, %v219
    %v221 = vrot.slane %v190, 1
    %v222 = vsel %vm204, %v216, %v221
    %v223 = vrot.slane %v191, 1
    %v224 = vsel %vm204, %v219, %v223
    %v233 = vpack.c.bf16 %v212, %v207
    %v234 = vpack.c.bf16 %v214, %v210
    %v235 = vpack.c.bf16 %v222, %v217
    %v236 = vpack.c.bf16 %v224, %v220
    %s237 = scalar_lea.vmem [#allocation7], 72
    %v238 = vld [vmem:[%s237] sm:$0xf]
    %v239 = vld [vmem:[%s237 + $0x4] sm:$0xf]
    %v240 = vld [vmem:[%s237 + $0x8] sm:$0xf]
    %v241 = vld [vmem:[%s237 + $0xc] sm:$0xf]
    %v242 = vld [vmem:[%s237 + $0x10] sm:$0xf]
    %v243 = vld [vmem:[%s237 + $0x14] sm:$0xf]
    %v244 = vld [vmem:[%s237 + $0x18] sm:$0xf]
    %v245 = vld [vmem:[%s237 + $0x1c] sm:$0xf]
    %v246 = vld [vmem:[%s237 + $0x20] sm:$0xf]
    %v247 = vld [vmem:[%s237 + $0x24] sm:$0xf]
    %v248 = vld [vmem:[%s237 + $0x28] sm:$0xf]
    %v249 = vld [vmem:[%s237 + $0x2c] sm:$0xf]
    %v250 = vld [vmem:[%s237 + $0x30] sm:$0xf]
    %v251 = vld [vmem:[%s237 + $0x34] sm:$0xf]
    %v252 = vld [vmem:[%s237 + $0x38] sm:$0xf]
    %v253 = vld [vmem:[%s237 + $0x3c] sm:$0xf]
    %v254 = vld [vmem:[%s237 + $0x40] sm:$0xf]
    %v255 = vld [vmem:[%s237 + $0x44] sm:$0xf]
    %v274 = vunpack.c.l.b16 %v238
    %v275 = vunpack.c.l.b16 %v239
    %v276 = vunpack.c.l.b16 %v240
    %v277 = vunpack.c.l.b16 %v241
    %v278 = vunpack.c.l.b16 %v242
    %v279 = vunpack.c.l.b16 %v243
    %v280 = vunpack.c.l.b16 %v244
    %v281 = vunpack.c.l.b16 %v245
    %v282 = vunpack.c.l.b16 %v246
    %v283 = vunpack.c.l.b16 %v247
    %v284 = vunpack.c.l.b16 %v248
    %v285 = vunpack.c.l.b16 %v249
    %v286 = vunpack.c.l.b16 %v250
    %v287 = vunpack.c.l.b16 %v251
    %v288 = vunpack.c.l.b16 %v252
    %v289 = vunpack.c.l.b16 %v253
    %v290 = vunpack.c.l.b16 %v254
    %v291 = vunpack.c.l.b16 %v255
    %v292 = vpack.c.b16 %v275, %v274
    %v293 = vpack.c.b16 %v277, %v276
    %v294 = vpack.c.b16 %v279, %v278
    %v295 = vpack.c.b16 %v281, %v280
    %v296 = vpack.c.b16 %v283, %v282
    %v297 = vpack.c.b16 %v285, %v284
    %v298 = vpack.c.b16 %v287, %v286
    %v299 = vpack.c.b16 %v289, %v288
    %v300 = vpack.c.b16 %v291, %v290
    %vm310 = vcmask 130048
    %v312 = vsel %vm310, %v234, 0
    %v315 = vsel %vm310, %v236, 0
    %317 = vmatprep.subr.bf16.mxu0 0
    %318 = vmatpush1.bf16.msra.mxu0 %v292
    %319 = vmatprep.subr.bf16.mxu0 0
    %320 = vmatpush1.bf16.msra.mxu0 %v293
    %321 = vmatprep.subr.bf16.mxu0 0
    %322 = vmatpush1.bf16.msra.mxu0 %v294
    %323 = vmatprep.subr.bf16.mxu0 0
    %324 = vmatpush1.bf16.msra.mxu0 %v295
    %325 = vmatprep.subr.bf16.mxu0 0
    %326 = vmatpush1.bf16.msra.mxu0 %v296
    %327 = vmatprep.subr.bf16.mxu0 0
    %328 = vmatpush1.bf16.msra.mxu0 %v297
    %329 = vmatprep.subr.bf16.mxu0 0
    %330 = vmatpush1.bf16.msra.mxu0 %v298
    %331 = vmatprep.subr.bf16.mxu0 0
    %332 = vmatpush1.bf16.msra.mxu0 %v299
    %333 = vmatprep.subr.bf16.mxu0 0
    %334 = vmatpush1.bf16.msra.mxu0 %v300
    %335 = vmatprep.subr.bf16.mxu0 0
    %336 = vmatpush1.bf16.msra.mxu0 0
    %337 = vmatprep.subr.bf16.mxu0 0
    %338 = vmatpush1.bf16.msra.mxu0 0
    %339 = vmatprep.subr.bf16.mxu0 0
    %340 = vmatpush1.bf16.msra.mxu0 0
    %341 = vmatprep.subr.bf16.mxu0 0
    %342 = vmatpush1.bf16.msra.mxu0 0
    %343 = vmatprep.subr.bf16.mxu0 0
    %344 = vmatpush1.bf16.msra.mxu0 0
    %345 = vmatprep.subr.bf16.mxu0 0
    %346 = vmatpush1.bf16.msra.mxu0 0
    %347 = vmatprep.subr.bf16.mxu0 0
    %348 = vmatpush1.bf16.msra.mxu0 0
    %349 = vmatprep.mubr.bf16.mxu0 %v312
    %350 = vmatmul.mubr.bf16.gmra.mrb[0].mxu0 %v233
    %v351 = vpop.f32.mrb[0].mxu0
    %v352 = vadd.f32 0.0, %v351
    %v353 = vpop.f32.mrb[0].mxu0
    %v354 = vpop.f32.mrb[0].mxu0
    %v355 = vadd.f32 0.0, %v354
    %v356 = vpop.f32.mrb[0].mxu0
    %357 = vmatprep.mubr.bf16.mxu0 %v315
    %358 = vmatmul.mubr.bf16.gmra.mrb[0].mxu0 %v235
    %v359 = vpop.f32.mrb[0].mxu0
    %v360 = vadd.f32 0.0, %v359
    %v361 = vpop.f32.mrb[0].mxu0
    %v362 = vpop.f32.mrb[0].mxu0
    %v363 = vadd.f32 0.0, %v362
    %v364 = vpop.f32.mrb[0].mxu0
    %365 = vdwg.mxu0
    %v384 = vunpack.c.l.b16 %v166
    %v385 = vunpack.c.l.b16 %v167
    %v386 = vunpack.c.l.b16 %v168
    %v387 = vunpack.c.l.b16 %v169
    %v388 = vunpack.c.l.b16 %v170
    %v389 = vunpack.c.l.b16 %v171
    %v390 = vunpack.c.l.b16 %v172
    %v391 = vunpack.c.l.b16 %v173
    %v392 = vunpack.c.l.b16 %v174
    %v393 = vunpack.c.l.b16 %v175
    %v394 = vunpack.c.l.b16 %v176
    %v395 = vunpack.c.l.b16 %v177
    %v396 = vunpack.c.l.b16 %v178
    %v397 = vunpack.c.l.b16 %v179
    %v398 = vunpack.c.l.b16 %v180
    %v399 = vunpack.c.l.b16 %v181
    %v400 = vunpack.c.l.b16 %v182
    %v401 = vunpack.c.l.b16 %v183
    %v402 = vpack.c.b16 %v385, %v384
    %v403 = vpack.c.b16 %v387, %v386
    %v404 = vpack.c.b16 %v389, %v388
    %v405 = vpack.c.b16 %v391, %v390
    %v406 = vpack.c.b16 %v393, %v392
    %v407 = vpack.c.b16 %v395, %v394
    %v408 = vpack.c.b16 %v397, %v396
    %v409 = vpack.c.b16 %v399, %v398
    %v410 = vpack.c.b16 %v401, %v400
    %v421 = vsel %vm310, %v163, 0
    %v424 = vsel %vm310, %v165, 0
    %426 = vmatprep.subr.bf16.mxu0 0
    %427 = vmatpush1.bf16.msra.mxu0 %v402
    %428 = vmatprep.subr.bf16.mxu0 0
    %429 = vmatpush1.bf16.msra.mxu0 %v403
    %430 = vmatprep.subr.bf16.mxu0 0
    %431 = vmatpush1.bf16.msra.mxu0 %v404
    %432 = vmatprep.subr.bf16.mxu0 0
    %433 = vmatpush1.bf16.msra.mxu0 %v405
    %434 = vmatprep.subr.bf16.mxu0 0
    %435 = vmatpush1.bf16.msra.mxu0 %v406
    %436 = vmatprep.subr.bf16.mxu0 0
    %437 = vmatpush1.bf16.msra.mxu0 %v407
    %438 = vmatprep.subr.bf16.mxu0 0
    %439 = vmatpush1.bf16.msra.mxu0 %v408
    %440 = vmatprep.subr.bf16.mxu0 0
    %441 = vmatpush1.bf16.msra.mxu0 %v409
    %442 = vmatprep.subr.bf16.mxu0 0
    %443 = vmatpush1.bf16.msra.mxu0 %v410
    %444 = vmatprep.subr.bf16.mxu0 0
    %445 = vmatpush1.bf16.msra.mxu0 0
    %446 = vmatprep.subr.bf16.mxu0 0
    %447 = vmatpush1.bf16.msra.mxu0 0
    %448 = vmatprep.subr.bf16.mxu0 0
    %449 = vmatpush1.bf16.msra.mxu0 0
    %450 = vmatprep.subr.bf16.mxu0 0
    %451 = vmatpush1.bf16.msra.mxu0 0
    %452 = vmatprep.subr.bf16.mxu0 0
    %453 = vmatpush1.bf16.msra.mxu0 0
    %454 = vmatprep.subr.bf16.mxu0 0
    %455 = vmatpush1.bf16.msra.mxu0 0
    %456 = vmatprep.subr.bf16.mxu0 0
    %457 = vmatpush1.bf16.msra.mxu0 0
    %458 = vmatprep.mubr.bf16.mxu0 %v421
    %459 = vmatmul.mubr.bf16.gmra.mrb[0].mxu0 %v162
    %v460 = vpop.f32.mrb[0].mxu0
    %v461 = vadd.f32 %v352, %v460
    %v462 = vpop.f32.mrb[0].mxu0
    %v463 = vpop.f32.mrb[0].mxu0
    %v464 = vadd.f32 %v355, %v463
    %v465 = vpop.f32.mrb[0].mxu0
    %466 = vmatprep.mubr.bf16.mxu0 %v424
    %467 = vmatmul.mubr.bf16.gmra.mrb[0].mxu0 %v164
    %v468 = vpop.f32.mrb[0].mxu0
    %v469 = vadd.f32 %v360, %v468
    %v470 = vpop.f32.mrb[0].mxu0
    %v471 = vpop.f32.mrb[0].mxu0
    %v472 = vadd.f32 %v363, %v471
    %v473 = vpop.f32.mrb[0].mxu0
    %474 = vdwg.mxu0
    %v475 = vld [vmem:[#allocation2] sm:$0xfc]
    %v476 = vld [vmem:[#allocation2 + $0x8] sm:$0xfc]
    %v477 = vld [vmem:[#allocation2 + $0x20] sm:$0x3]
    %v478 = vld [vmem:[#allocation2 + $0x28] sm:$0x3]
    %v479 = vld [vmem:[#allocation2 + $0x30] sm:$0xfc]
    %v480 = vld [vmem:[#allocation2 + $0x38] sm:$0xfc]
    %v481 = vld [vmem:[#allocation2 + $0x50] sm:$0x3]
    %v482 = vld [vmem:[#allocation2 + $0x58] sm:$0x3]
    %vm491 = vcmask 1045504
    %v492 = vrot.slane %v475, 2
    %v493 = vrot.slane %v156, 2
    %v494 = vsel %vm491, %v492, %v493
    %v495 = vrot.slane %v476, 2
    %v496 = vrot.slane %v157, 2
    %v497 = vsel %vm491, %v495, %v496
    %v498 = vrot.slane %v477, 2
    %v499 = vsel %vm491, %v493, %v498
    %v500 = vrot.slane %v478, 2
    %v501 = vsel %vm491, %v496, %v500
    %v502 = vrot.slane %v479, 2
    %v503 = vrot.slane %v160, 2
    %v504 = vsel %vm491, %v502, %v503
    %v505 = vrot.slane %v480, 2
    %v506 = vrot.slane %v161, 2
    %v507 = vsel %vm491, %v505, %v506
    %v508 = vrot.slane %v481, 2
    %v509 = vsel %vm491, %v503, %v508
    %v510 = vrot.slane %v482, 2
    %v511 = vsel %vm491, %v506, %v510
    %v520 = vpack.c.bf16 %v499, %v494
    %v521 = vpack.c.bf16 %v501, %v497
    %v522 = vpack.c.bf16 %v509, %v504
    %v523 = vpack.c.bf16 %v511, %v507
    %s524 = scalar_lea.vmem [#allocation7], 144
    %v525 = vld [vmem:[%s524] sm:$0xf]
    %v526 = vld [vmem:[%s524 + $0x4] sm:$0xf]
    %v527 = vld [vmem:[%s524 + $0x8] sm:$0xf]
    %v528 = vld [vmem:[%s524 + $0xc] sm:$0xf]
    %v529 = vld [vmem:[%s524 + $0x10] sm:$0xf]
    %v530 = vld [vmem:[%s524 + $0x14] sm:$0xf]
    %v531 = vld [vmem:[%s524 + $0x18] sm:$0xf]
    %v532 = vld [vmem:[%s524 + $0x1c] sm:$0xf]
    %v533 = vld [vmem:[%s524 + $0x20] sm:$0xf]
    %v534 = vld [vmem:[%s524 + $0x24] sm:$0xf]
    %v535 = vld [vmem:[%s524 + $0x28] sm:$0xf]
    %v536 = vld [vmem:[%s524 + $0x2c] sm:$0xf]
    %v537 = vld [vmem:[%s524 + $0x30] sm:$0xf]
    %v538 = vld [vmem:[%s524 + $0x34] sm:$0xf]
    %v539 = vld [vmem:[%s524 + $0x38] sm:$0xf]
    %v540 = vld [vmem:[%s524 + $0x3c] sm:$0xf]
    %v541 = vld [vmem:[%s524 + $0x40] sm:$0xf]
    %v542 = vld [vmem:[%s524 + $0x44] sm:$0xf]
    %v561 = vunpack.c.l.b16 %v525
    %v562 = vunpack.c.l.b16 %v526
    %v563 = vunpack.c.l.b16 %v527
    %v564 = vunpack.c.l.b16 %v528
    %v565 = vunpack.c.l.b16 %v529
    %v566 = vunpack.c.l.b16 %v530
    %v567 = vunpack.c.l.b16 %v531
    %v568 = vunpack.c.l.b16 %v532
    %v569 = vunpack.c.l.b16 %v533
    %v570 = vunpack.c.l.b16 %v534
    %v571 = vunpack.c.l.b16 %v535
    %v572 = vunpack.c.l.b16 %v536
    %v573 = vunpack.c.l.b16 %v537
    %v574 = vunpack.c.l.b16 %v538
    %v575 = vunpack.c.l.b16 %v539
    %v576 = vunpack.c.l.b16 %v540
    %v577 = vunpack.c.l.b16 %v541
    %v578 = vunpack.c.l.b16 %v542
    %v579 = vpack.c.b16 %v562, %v561
    %v580 = vpack.c.b16 %v564, %v563
    %v581 = vpack.c.b16 %v566, %v565
    %v582 = vpack.c.b16 %v568, %v567
    %v583 = vpack.c.b16 %v570, %v569
    %v584 = vpack.c.b16 %v572, %v571
    %v585 = vpack.c.b16 %v574, %v573
    %v586 = vpack.c.b16 %v576, %v575
    %v587 = vpack.c.b16 %v578, %v577
    %v598 = vsel %vm310, %v521, 0
    %v601 = vsel %vm310, %v523, 0
    %603 = vmatprep.subr.bf16.mxu0 0
    %604 = vmatpush1.bf16.msra.mxu0 %v579
    %605 = vmatprep.subr.bf16.mxu0 0
    %606 = vmatpush1.bf16.msra.mxu0 %v580
    %607 = vmatprep.subr.bf16.mxu0 0
    %608 = vmatpush1.bf16.msra.mxu0 %v581
    %609 = vmatprep.subr.bf16.mxu0 0
    %610 = vmatpush1.bf16.msra.mxu0 %v582
    %611 = vmatprep.subr.bf16.mxu0 0
    %612 = vmatpush1.bf16.msra.mxu0 %v583
    %613 = vmatprep.subr.bf16.mxu0 0
    %614 = vmatpush1.bf16.msra.mxu0 %v584
    %615 = vmatprep.subr.bf16.mxu0 0
    %616 = vmatpush1.bf16.msra.mxu0 %v585
    %617 = vmatprep.subr.bf16.mxu0 0
    %618 = vmatpush1.bf16.msra.mxu0 %v586
    %619 = vmatprep.subr.bf16.mxu0 0
    %620 = vmatpush1.bf16.msra.mxu0 %v587
    %621 = vmatprep.subr.bf16.mxu0 0
    %622 = vmatpush1.bf16.msra.mxu0 0
    %623 = vmatprep.subr.bf16.mxu0 0
    %624 = vmatpush1.bf16.msra.mxu0 0
    %625 = vmatprep.subr.bf16.mxu0 0
    %626 = vmatpush1.bf16.msra.mxu0 0
    %627 = vmatprep.subr.bf16.mxu0 0
    %628 = vmatpush1.bf16.msra.mxu0 0
    %629 = vmatprep.subr.bf16.mxu0 0
    %630 = vmatpush1.bf16.msra.mxu0 0
    %631 = vmatprep.subr.bf16.mxu0 0
    %632 = vmatpush1.bf16.msra.mxu0 0
    %633 = vmatprep.subr.bf16.mxu0 0
    %634 = vmatpush1.bf16.msra.mxu0 0
    %635 = vmatprep.mubr.bf16.mxu0 %v598
    %636 = vmatmul.mubr.bf16.gmra.mrb[0].mxu0 %v520
    %v637 = vpop.f32.mrb[0].mxu0
    %v638 = vadd.f32 0.0, %v637
    %v639 = vpop.f32.mrb[0].mxu0
    %v640 = vpop.f32.mrb[0].mxu0
    %v641 = vadd.f32 0.0, %v640
    %v642 = vpop.f32.mrb[0].mxu0
    %643 = vmatprep.mubr.bf16.mxu0 %v601
    %644 = vmatmul.mubr.bf16.gmra.mrb[0].mxu0 %v522
    %v645 = vpop.f32.mrb[0].mxu0
    %v646 = vadd.f32 0.0, %v645
    %v647 = vpop.f32.mrb[0].mxu0
    %v648 = vpop.f32.mrb[0].mxu0
    %v649 = vadd.f32 0.0, %v648
    %v650 = vpop.f32.mrb[0].mxu0
    %651 = vdwg.mxu0
    %v652 = vadd.f32 %v461, %v638
    %v653 = vadd.f32 %v464, %v641
    %v654 = vadd.f32 %v469, %v646
    %v655 = vadd.f32 %v472, %v649
    %v656 = vadd.f32 %v652, %v653
    %v657 = vadd.f32 %v656, %v654
    %v658 = vadd.f32 %v657, %v655
    %v659 = vrot.slane %v658, 4
    %v660 = vadd.f32 %v658, %v659
    %v661 = vrot.slane %v660, 2
    %v662 = vadd.f32 %v660, %v661
    %v663 = vrot.slane %v662, 1
    %v664 = vadd.f32 %v662, %v663
    %v665 = vmul.f32 %v652, %v652
    %v666 = vmul.f32 %v653, %v653
    %v667 = vmul.f32 %v654, %v654
    %v668 = vmul.f32 %v655, %v655
    %v669 = vadd.f32 %v665, %v666
    %v670 = vadd.f32 %v669, %v667
    %v671 = vadd.f32 %v670, %v668
    %v672 = vrot.slane %v671, 4
    %v673 = vadd.f32 %v671, %v672
    %v674 = vrot.slane %v673, 2
    %v675 = vadd.f32 %v673, %v674
    %v676 = vrot.slane %v675, 1
    %v677 = vadd.f32 %v675, %v676
    %v678 = vsel %vm112, %v664, %v677
    %679 = vrot.lane.b32.xlu0 %v678, 8
    %v680 = vpop.permute.xlu0 %679
    %v681 = vadd.f32 %v678, %v680
    %682 = vrot.lane.b32.xlu0 %v681, 16
    %v683 = vpop.permute.xlu0 %682
    %v684 = vadd.f32 %v681, %v683
    %685 = vrot.lane.b32.xlu0 %v684, 32
    %v686 = vpop.permute.xlu0 %685
    %v687 = vadd.f32 %v684, %v686
    %688 = vrot.lane.b32.xlu0 %v687, 64
    %v689 = vpop.permute.xlu0 %688
    %v690 = vadd.f32 %v687, %v689
    %v691 = vmul.f32 %v690, 0.001953125
    %v692 = vmul.f32 %v691, %v691
    %v694 = vrot.slane %v692, 7
    %v696 = vsub.f32 %v691, %v694
    %v697 = vadd.f32 %v696, 1e-05
    %v698 = vrsqrt.pop %v697
    %v699 = vld [vmem:[%s3] sm:$0x1]
    %v701 = vlaneseq
    %v702 = vshrl.u32 %v701, 7
    %v703 = vsub.s32 0, %v702
    %v704 = vrot.slane %v699, %v703
    %v706 = vmul.f32 %v698, %v704
    %v707 = vlaneseq
    %v708 = vshrl.u32 %v707, 7
    %v709 = vsub.s32 0, %v708
    %v710 = vrot.slane %v691, %v709
    %v711 = vsub.f32 %v652, %v710
    %v712 = vsub.f32 %v653, %v710
    %v713 = vsub.f32 %v654, %v710
    %v714 = vsub.f32 %v655, %v710
    %v715 = vlaneseq
    %v716 = vshrl.u32 %v715, 7
    %v717 = vsub.s32 1, %v716
    %v718 = vrot.slane %v706, %v717
    %v719 = vmul.f32 %v711, %v718
    %v720 = vmul.f32 %v712, %v718
    %v721 = vmul.f32 %v713, %v718
    %v722 = vmul.f32 %v714, %v718
    %v723 = vld [vmem:[%s4] sm:$0x1]
    %v725 = vlaneseq
    %v726 = vshrl.u32 %v725, 7
    %v727 = vsub.s32 0, %v726
    %v728 = vrot.slane %v723, %v727
    %v730 = vadd.f32 %v719, %v728
    %v731 = vadd.f32 %v720, %v728
    %v732 = vadd.f32 %v721, %v728
    %v733 = vadd.f32 %v722, %v728
    %s734 = sld [smem:[#allocation3]]
    %vm735 = vcmp.gt.f32.partialorder %v730, 0.0
    %vm736 = vcmp.gt.f32.partialorder %v731, 0.0
    %vm737 = vcmp.gt.f32.partialorder %v732, 0.0
    %vm738 = vcmp.gt.f32.partialorder %v733, 0.0
    %v739 = vstv %s734
    %v740 = vmul.f32 %v739, %v730
    %v741 = vmul.f32 %v739, %v731
    %v742 = vmul.f32 %v739, %v732
    %v743 = vmul.f32 %v739, %v733
    %v744 = vsel %vm735, %v730, %v740
    %v745 = vsel %vm736, %v731, %v741
    %v746 = vsel %vm737, %v732, %v742
    %v747 = vsel %vm738, %v733, %v743
    %v752 = vrot.slane %v744, 7
    %v753 = vrot.slane %v745, 7
    %v754 = vsel %vm112, %v752, %v753
    %v755 = vrot.slane %v746, 7
    %v756 = vrot.slane %v747, 7
    %v757 = vsel %vm112, %v755, %v756
    %758 = vrot.lane.b32.xlu0 %v752, 8
    %v759 = vpop.permute.xlu0 %758
    %760 = vrot.lane.b32.xlu0 %v754, 8
    %v761 = vpop.permute.xlu0 %760
    %762 = vrot.lane.b32.xlu0 %v753, 8
    %v763 = vpop.permute.xlu0 %762
    %764 = vrot.lane.b32.xlu0 %v755, 8
    %v765 = vpop.permute.xlu0 %764
    %766 = vrot.lane.b32.xlu0 %v757, 8
    %v767 = vpop.permute.xlu0 %766
    %768 = vrot.lane.b32.xlu0 %v756, 8
    %v769 = vpop.permute.xlu0 %768
    %776 = vst.msk [vmem:[#allocation2] sm:$0xfe] %vm137, %v759
    %777 = vst.msk [vmem:[#allocation2 + $0x8] sm:$0xfe] %vm139, %v759
    %778 = vst.msk [vmem:[#allocation2 + $0x10] sm:$0xff] %vm141, %v761
    %779 = vst.msk [vmem:[#allocation2 + $0x18] sm:$0xff] %vm88, %v761
    %780 = vst.msk [vmem:[#allocation2 + $0x20] sm:$0x1] %vm144, %v763
    %781 = vst.msk [vmem:[#allocation2 + $0x28] sm:$0x1] %vm146, %v763
    %782 = vst.msk [vmem:[#allocation2 + $0x30] sm:$0xfe] %vm137, %v765
    %783 = vst.msk [vmem:[#allocation2 + $0x38] sm:$0xfe] %vm139, %v765
    %784 = vst.msk [vmem:[#allocation2 + $0x40] sm:$0xff] %vm141, %v767
    %785 = vst.msk [vmem:[#allocation2 + $0x48] sm:$0xff] %vm88, %v767
    %786 = vst.msk [vmem:[#allocation2 + $0x50] sm:$0x1] %vm144, %v769
    %787 = vst.msk [vmem:[#allocation2 + $0x58] sm:$0x1] %vm146, %v769
    %v788 = vld [vmem:[#allocation2] sm:$0xff]
    %v789 = vld [vmem:[#allocation2 + $0x8] sm:$0xff]
    %v790 = vld [vmem:[#allocation2 + $0x10] sm:$0xff]
    %v791 = vld [vmem:[#allocation2 + $0x18] sm:$0xff]
    %v792 = vld [vmem:[#allocation2 + $0x30] sm:$0xff]
    %v793 = vld [vmem:[#allocation2 + $0x38] sm:$0xff]
    %v794 = vld [vmem:[#allocation2 + $0x40] sm:$0xff]
    %v795 = vld [vmem:[#allocation2 + $0x48] sm:$0xff]
    %v796 = vpack.c.bf16 %v790, %v788
    %v797 = vpack.c.bf16 %v791, %v789
    %v798 = vpack.c.bf16 %v794, %v792
    %v799 = vpack.c.bf16 %v795, %v793
    %v800 = vld [vmem:[#allocation9] sm:$0xf]
    %v801 = vld [vmem:[#allocation9 + $0x4] sm:$0xf]
    %v802 = vld [vmem:[#allocation9 + $0x8] sm:$0xf]
    %v803 = vld [vmem:[#allocation9 + $0xc] sm:$0xf]
    %v804 = vld [vmem:[#allocation9 + $0x10] sm:$0xf]
    %v805 = vld [vmem:[#allocation9 + $0x14] sm:$0xf]
    %v806 = vld [vmem:[#allocation9 + $0x18] sm:$0xf]
    %v807 = vld [vmem:[#allocation9 + $0x1c] sm:$0xf]
    %v808 = vld [vmem:[#allocation9 + $0x20] sm:$0xf]
    %v809 = vld [vmem:[#allocation9 + $0x24] sm:$0xf]
    %v810 = vld [vmem:[#allocation9 + $0x28] sm:$0xf]
    %v811 = vld [vmem:[#allocation9 + $0x2c] sm:$0xf]
    %v812 = vld [vmem:[#allocation9 + $0x30] sm:$0xf]
    %v813 = vld [vmem:[#allocation9 + $0x34] sm:$0xf]
    %v814 = vld [vmem:[#allocation9 + $0x38] sm:$0xf]
    %v815 = vld [vmem:[#allocation9 + $0x3c] sm:$0xf]
    %v816 = vld [vmem:[#allocation9 + $0x40] sm:$0xf]
    %v817 = vld [vmem:[#allocation9 + $0x44] sm:$0xf]
    %v818 = vld [vmem:[#allocation2] sm:$0xfe]
    %v819 = vld [vmem:[#allocation2 + $0x8] sm:$0xfe]
    %v820 = vld [vmem:[#allocation2 + $0x20] sm:$0x1]
    %v821 = vld [vmem:[#allocation2 + $0x28] sm:$0x1]
    %v822 = vld [vmem:[#allocation2 + $0x30] sm:$0xfe]
    %v823 = vld [vmem:[#allocation2 + $0x38] sm:$0xfe]
    %v824 = vld [vmem:[#allocation2 + $0x50] sm:$0x1]
    %v825 = vld [vmem:[#allocation2 + $0x58] sm:$0x1]
    %v838 = vrot.slane %v818, 1
    %v839 = vrot.slane %v790, 1
    %v840 = vsel %vm204, %v838, %v839
    %v841 = vrot.slane %v819, 1
    %v842 = vrot.slane %v791, 1
    %v843 = vsel %vm204, %v841, %v842
    %v844 = vrot.slane %v820, 1
    %v845 = vsel %vm204, %v839, %v844
    %v846 = vrot.slane %v821, 1
    %v847 = vsel %vm204, %v842, %v846
    %v848 = vrot.slane %v822, 1
    %v849 = vrot.slane %v794, 1
    %v850 = vsel %vm204, %v848, %v849
    %v851 = vrot.slane %v823, 1
    %v852 = vrot.slane %v795, 1
    %v853 = vsel %vm204, %v851, %v852
    %v854 = vrot.slane %v824, 1
    %v855 = vsel %vm204, %v849, %v854
    %v856 = vrot.slane %v825, 1
    %v857 = vsel %vm204, %v852, %v856
    %v866 = vpack.c.bf16 %v845, %v840
    %v867 = vpack.c.bf16 %v847, %v843
    %v868 = vpack.c.bf16 %v855, %v850
    %v869 = vpack.c.bf16 %v857, %v853
    %s870 = scalar_lea.vmem [#allocation9], 72
    %v871 = vld [vmem:[%s870] sm:$0xf]
    %v872 = vld [vmem:[%s870 + $0x4] sm:$0xf]
    %v873 = vld [vmem:[%s870 + $0x8] sm:$0xf]
    %v874 = vld [vmem:[%s870 + $0xc] sm:$0xf]
    %v875 = vld [vmem:[%s870 + $0x10] sm:$0xf]
    %v876 = vld [vmem:[%s870 + $0x14] sm:$0xf]
    %v877 = vld [vmem:[%s870 + $0x18] sm:$0xf]
    %v878 = vld [vmem:[%s870 + $0x1c] sm:$0xf]
    %v879 = vld [vmem:[%s870 + $0x20] sm:$0xf]
    %v880 = vld [vmem:[%s870 + $0x24] sm:$0xf]
    %v881 = vld [vmem:[%s870 + $0x28] sm:$0xf]
    %v882 = vld [vmem:[%s870 + $0x2c] sm:$0xf]
    %v883 = vld [vmem:[%s870 + $0x30] sm:$0xf]
    %v884 = vld [vmem:[%s870 + $0x34] sm:$0xf]
    %v885 = vld [vmem:[%s870 + $0x38] sm:$0xf]
    %v886 = vld [vmem:[%s870 + $0x3c] sm:$0xf]
    %v887 = vld [vmem:[%s870 + $0x40] sm:$0xf]
    %v888 = vld [vmem:[%s870 + $0x44] sm:$0xf]
    %v907 = vunpack.c.l.b16 %v871
    %v908 = vunpack.c.l.b16 %v872
    %v909 = vunpack.c.l.b16 %v873
    %v910 = vunpack.c.l.b16 %v874
    %v911 = vunpack.c.l.b16 %v875
    %v912 = vunpack.c.l.b16 %v876
    %v913 = vunpack.c.l.b16 %v877
    %v914 = vunpack.c.l.b16 %v878
    %v915 = vunpack.c.l.b16 %v879
    %v916 = vunpack.c.l.b16 %v880
    %v917 = vunpack.c.l.b16 %v881
    %v918 = vunpack.c.l.b16 %v882
    %v919 = vunpack.c.l.b16 %v883
    %v920 = vunpack.c.l.b16 %v884
    %v921 = vunpack.c.l.b16 %v885
    %v922 = vunpack.c.l.b16 %v886
    %v923 = vunpack.c.l.b16 %v887
    %v924 = vunpack.c.l.b16 %v888
    %v925 = vpack.c.b16 %v908, %v907
    %v926 = vpack.c.b16 %v910, %v909
    %v927 = vpack.c.b16 %v912, %v911
    %v928 = vpack.c.b16 %v914, %v913
    %v929 = vpack.c.b16 %v916, %v915
    %v930 = vpack.c.b16 %v918, %v917
    %v931 = vpack.c.b16 %v920, %v919
    %v932 = vpack.c.b16 %v922, %v921
    %v933 = vpack.c.b16 %v924, %v923
    %v944 = vsel %vm310, %v867, 0
    %v947 = vsel %vm310, %v869, 0
    %949 = vmatprep.subr.bf16.mxu0 0
    %950 = vmatpush1.bf16.msra.mxu0 %v925
    %951 = vmatprep.subr.bf16.mxu0 0
    %952 = vmatpush1.bf16.msra.mxu0 %v926
    %953 = vmatprep.subr.bf16.mxu0 0
    %954 = vmatpush1.bf16.msra.mxu0 %v927
    %955 = vmatprep.subr.bf16.mxu0 0
    %956 = vmatpush1.bf16.msra.mxu0 %v928
    %957 = vmatprep.subr.bf16.mxu0 0
    %958 = vmatpush1.bf16.msra.mxu0 %v929
    %959 = vmatprep.subr.bf16.mxu0 0
    %960 = vmatpush1.bf16.msra.mxu0 %v930
    %961 = vmatprep.subr.bf16.mxu0 0
    %962 = vmatpush1.bf16.msra.mxu0 %v931
    %963 = vmatprep.subr.bf16.mxu0 0
    %964 = vmatpush1.bf16.msra.mxu0 %v932
    %965 = vmatprep.subr.bf16.mxu0 0
    %966 = vmatpush1.bf16.msra.mxu0 %v933
    %967 = vmatprep.subr.bf16.mxu0 0
    %968 = vmatpush1.bf16.msra.mxu0 0
    %969 = vmatprep.subr.bf16.mxu0 0
    %970 = vmatpush1.bf16.msra.mxu0 0
    %971 = vmatprep.subr.bf16.mxu0 0
    %972 = vmatpush1.bf16.msra.mxu0 0
    %973 = vmatprep.subr.bf16.mxu0 0
    %974 = vmatpush1.bf16.msra.mxu0 0
    %975 = vmatprep.subr.bf16.mxu0 0
    %976 = vmatpush1.bf16.msra.mxu0 0
    %977 = vmatprep.subr.bf16.mxu0 0
    %978 = vmatpush1.bf16.msra.mxu0 0
    %979 = vmatprep.subr.bf16.mxu0 0
    %980 = vmatpush1.bf16.msra.mxu0 0
    %981 = vmatprep.mubr.bf16.mxu0 %v944
    %982 = vmatmul.mubr.bf16.gmra.mrb[0].mxu0 %v866
    %v983 = vpop.f32.mrb[0].mxu0
    %v984 = vadd.f32 0.0, %v983
    %v985 = vpop.f32.mrb[0].mxu0
    %v986 = vpop.f32.mrb[0].mxu0
    %v987 = vadd.f32 0.0, %v986
    %v988 = vpop.f32.mrb[0].mxu0
    %989 = vmatprep.mubr.bf16.mxu0 %v947
    %990 = vmatmul.mubr.bf16.gmra.mrb[0].mxu0 %v868
    %v991 = vpop.f32.mrb[0].mxu0
    %v992 = vadd.f32 0.0, %v991
    %v993 = vpop.f32.mrb[0].mxu0
    %v994 = vpop.f32.mrb[0].mxu0
    %v995 = vadd.f32 0.0, %v994
    %v996 = vpop.f32.mrb[0].mxu0
    %997 = vdwg.mxu0
    %v1016 = vunpack.c.l.b16 %v800
    %v1017 = vunpack.c.l.b16 %v801
    %v1018 = vunpack.c.l.b16 %v802
    %v1019 = vunpack.c.l.b16 %v803
    %v1020 = vunpack.c.l.b16 %v804
    %v1021 = vunpack.c.l.b16 %v805
    %v1022 = vunpack.c.l.b16 %v806
    %v1023 = vunpack.c.l.b16 %v807
    %v1024 = vunpack.c.l.b16 %v808
    %v1025 = vunpack.c.l.b16 %v809
    %v1026 = vunpack.c.l.b16 %v810
    %v1027 = vunpack.c.l.b16 %v811
    %v1028 = vunpack.c.l.b16 %v812
    %v1029 = vunpack.c.l.b16 %v813
    %v1030 = vunpack.c.l.b16 %v814
    %v1031 = vunpack.c.l.b16 %v815
    %v1032 = vunpack.c.l.b16 %v816
    %v1033 = vunpack.c.l.b16 %v817
    %v1034 = vpack.c.b16 %v1017, %v1016
    %v1035 = vpack.c.b16 %v1019, %v1018
    %v1036 = vpack.c.b16 %v1021, %v1020
    %v1037 = vpack.c.b16 %v1023, %v1022
    %v1038 = vpack.c.b16 %v1025, %v1024
    %v1039 = vpack.c.b16 %v1027, %v1026
    %v1040 = vpack.c.b16 %v1029, %v1028
    %v1041 = vpack.c.b16 %v1031, %v1030
    %v1042 = vpack.c.b16 %v1033, %v1032
    %v1053 = vsel %vm310, %v797, 0
    %v1056 = vsel %vm310, %v799, 0
    %1058 = vmatprep.subr.bf16.mxu0 0
    %1059 = vmatpush1.bf16.msra.mxu0 %v1034
    %1060 = vmatprep.subr.bf16.mxu0 0
    %1061 = vmatpush1.bf16.msra.mxu0 %v1035
    %1062 = vmatprep.subr.bf16.mxu0 0
    %1063 = vmatpush1.bf16.msra.mxu0 %v1036
    %1064 = vmatprep.subr.bf16.mxu0 0
    %1065 = vmatpush1.bf16.msra.mxu0 %v1037
    %1066 = vmatprep.subr.bf16.mxu0 0
    %1067 = vmatpush1.bf16.msra.mxu0 %v1038
    %1068 = vmatprep.subr.bf16.mxu0 0
    %1069 = vmatpush1.bf16.msra.mxu0 %v1039
    %1070 = vmatprep.subr.bf16.mxu0 0
    %1071 = vmatpush1.bf16.msra.mxu0 %v1040
    %1072 = vmatprep.subr.bf16.mxu0 0
    %1073 = vmatpush1.bf16.msra.mxu0 %v1041
    %1074 = vmatprep.subr.bf16.mxu0 0
    %1075 = vmatpush1.bf16.msra.mxu0 %v1042
    %1076 = vmatprep.subr.bf16.mxu0 0
    %1077 = vmatpush1.bf16.msra.mxu0 0
    %1078 = vmatprep.subr.bf16.mxu0 0
    %1079 = vmatpush1.bf16.msra.mxu0 0
    %1080 = vmatprep.subr.bf16.mxu0 0
    %1081 = vmatpush1.bf16.msra.mxu0 0
    %1082 = vmatprep.subr.bf16.mxu0 0
    %1083 = vmatpush1.bf16.msra.mxu0 0
    %1084 = vmatprep.subr.bf16.mxu0 0
    %1085 = vmatpush1.bf16.msra.mxu0 0
    %1086 = vmatprep.subr.bf16.mxu0 0
    %1087 = vmatpush1.bf16.msra.mxu0 0
    %1088 = vmatprep.subr.bf16.mxu0 0
    %1089 = vmatpush1.bf16.msra.mxu0 0
    %1090 = vmatprep.mubr.bf16.mxu0 %v1053
    %1091 = vmatmul.mubr.bf16.gmra.mrb[0].mxu0 %v796
    %v1092 = vpop.f32.mrb[0].mxu0
    %v1093 = vadd.f32 %v984, %v1092
    %v1094 = vpop.f32.mrb[0].mxu0
    %v1095 = vpop.f32.mrb[0].mxu0
    %v1096 = vadd.f32 %v987, %v1095
    %v1097 = vpop.f32.mrb[0].mxu0
    %1098 = vmatprep.mubr.bf16.mxu0 %v1056
    %1099 = vmatmul.mubr.bf16.gmra.mrb[0].mxu0 %v798
    %v1100 = vpop.f32.mrb[0].mxu0
    %v1101 = vadd.f32 %v992, %v1100
    %v1102 = vpop.f32.mrb[0].mxu0
    %v1103 = vpop.f32.mrb[0].mxu0
    %v1104 = vadd.f32 %v995, %v1103
    %v1105 = vpop.f32.mrb[0].mxu0
    %1106 = vdwg.mxu0
    %v1107 = vld [vmem:[#allocation2] sm:$0xfc]
    %v1108 = vld [vmem:[#allocation2 + $0x8] sm:$0xfc]
    %v1109 = vld [vmem:[#allocation2 + $0x20] sm:$0x3]
    %v1110 = vld [vmem:[#allocation2 + $0x28] sm:$0x3]
    %v1111 = vld [vmem:[#allocation2 + $0x30] sm:$0xfc]
    %v1112 = vld [vmem:[#allocation2 + $0x38] sm:$0xfc]
    %v1113 = vld [vmem:[#allocation2 + $0x50] sm:$0x3]
    %v1114 = vld [vmem:[#allocation2 + $0x58] sm:$0x3]
    %v1123 = vrot.slane %v1107, 2
    %v1124 = vrot.slane %v790, 2
    %v1125 = vsel %vm491, %v1123, %v1124
    %v1126 = vrot.slane %v1108, 2
    %v1127 = vrot.slane %v791, 2
    %v1128 = vsel %vm491, %v1126, %v1127
    %v1129 = vrot.slane %v1109, 2
    %v1130 = vsel %vm491, %v1124, %v1129
    %v1131 = vrot.slane %v1110, 2
    %v1132 = vsel %vm491, %v1127, %v1131
    %v1133 = vrot.slane %v1111, 2
    %v1134 = vrot.slane %v794, 2
    %v1135 = vsel %vm491, %v1133, %v1134
    %v1136 = vrot.slane %v1112, 2
    %v1137 = vrot.slane %v795, 2
    %v1138 = vsel %vm491, %v1136, %v1137
    %v1139 = vrot.slane %v1113, 2
    %v1140 = vsel %vm491, %v1134, %v1139
    %v1141 = vrot.slane %v1114, 2
    %v1142 = vsel %vm491, %v1137, %v1141
    %v1151 = vpack.c.bf16 %v1130, %v1125
    %v1152 = vpack.c.bf16 %v1132, %v1128
    %v1153 = vpack.c.bf16 %v1140, %v1135
    %v1154 = vpack.c.bf16 %v1142, %v1138
    %s1155 = scalar_lea.vmem [#allocation9], 144
    %v1156 = vld [vmem:[%s1155] sm:$0xf]
    %v1157 = vld [vmem:[%s1155 + $0x4] sm:$0xf]
    %v1158 = vld [vmem:[%s1155 + $0x8] sm:$0xf]
    %v1159 = vld [vmem:[%s1155 + $0xc] sm:$0xf]
    %v1160 = vld [vmem:[%s1155 + $0x10] sm:$0xf]
    %v1161 = vld [vmem:[%s1155 + $0x14] sm:$0xf]
    %v1162 = vld [vmem:[%s1155 + $0x18] sm:$0xf]
    %v1163 = vld [vmem:[%s1155 + $0x1c] sm:$0xf]
    %v1164 = vld [vmem:[%s1155 + $0x20] sm:$0xf]
    %v1165 = vld [vmem:[%s1155 + $0x24] sm:$0xf]
    %v1166 = vld [vmem:[%s1155 + $0x28] sm:$0xf]
    %v1167 = vld [vmem:[%s1155 + $0x2c] sm:$0xf]
    %v1168 = vld [vmem:[%s1155 + $0x30] sm:$0xf]
    %v1169 = vld [vmem:[%s1155 + $0x34] sm:$0xf]
    %v1170 = vld [vmem:[%s1155 + $0x38] sm:$0xf]
    %v1171 = vld [vmem:[%s1155 + $0x3c] sm:$0xf]
    %v1172 = vld [vmem:[%s1155 + $0x40] sm:$0xf]
    %v1173 = vld [vmem:[%s1155 + $0x44] sm:$0xf]
    %v1192 = vunpack.c.l.b16 %v1156
    %v1193 = vunpack.c.l.b16 %v1157
    %v1194 = vunpack.c.l.b16 %v1158
    %v1195 = vunpack.c.l.b16 %v1159
    %v1196 = vunpack.c.l.b16 %v1160
    %v1197 = vunpack.c.l.b16 %v1161
    %v1198 = vunpack.c.l.b16 %v1162
    %v1199 = vunpack.c.l.b16 %v1163
    %v1200 = vunpack.c.l.b16 %v1164
    %v1201 = vunpack.c.l.b16 %v1165
    %v1202 = vunpack.c.l.b16 %v1166
    %v1203 = vunpack.c.l.b16 %v1167
    %v1204 = vunpack.c.l.b16 %v1168
    %v1205 = vunpack.c.l.b16 %v1169
    %v1206 = vunpack.c.l.b16 %v1170
    %v1207 = vunpack.c.l.b16 %v1171
    %v1208 = vunpack.c.l.b16 %v1172
    %v1209 = vunpack.c.l.b16 %v1173
    %v1210 = vpack.c.b16 %v1193, %v1192
    %v1211 = vpack.c.b16 %v1195, %v1194
    %v1212 = vpack.c.b16 %v1197, %v1196
    %v1213 = vpack.c.b16 %v1199, %v1198
    %v1214 = vpack.c.b16 %v1201, %v1200
    %v1215 = vpack.c.b16 %v1203, %v1202
    %v1216 = vpack.c.b16 %v1205, %v1204
    %v1217 = vpack.c.b16 %v1207, %v1206
    %v1218 = vpack.c.b16 %v1209, %v1208
    %v1229 = vsel %vm310, %v1152, 0
    %v1232 = vsel %vm310, %v1154, 0
    %1234 = vmatprep.subr.bf16.mxu0 0
    %1235 = vmatpush1.bf16.msra.mxu0 %v1210
    %1236 = vmatprep.subr.bf16.mxu0 0
    %1237 = vmatpush1.bf16.msra.mxu0 %v1211
    %1238 = vmatprep.subr.bf16.mxu0 0
    %1239 = vmatpush1.bf16.msra.mxu0 %v1212
    %1240 = vmatprep.subr.bf16.mxu0 0
    %1241 = vmatpush1.bf16.msra.mxu0 %v1213
    %1242 = vmatprep.subr.bf16.mxu0 0
    %1243 = vmatpush1.bf16.msra.mxu0 %v1214
    %1244 = vmatprep.subr.bf16.mxu0 0
    %1245 = vmatpush1.bf16.msra.mxu0 %v1215
    %1246 = vmatprep.subr.bf16.mxu0 0
    %1247 = vmatpush1.bf16.msra.mxu0 %v1216
    %1248 = vmatprep.subr.bf16.mxu0 0
    %1249 = vmatpush1.bf16.msra.mxu0 %v1217
    %1250 = vmatprep.subr.bf16.mxu0 0
    %1251 = vmatpush1.bf16.msra.mxu0 %v1218
    %1252 = vmatprep.subr.bf16.mxu0 0
    %1253 = vmatpush1.bf16.msra.mxu0 0
    %1254 = vmatprep.subr.bf16.mxu0 0
    %1255 = vmatpush1.bf16.msra.mxu0 0
    %1256 = vmatprep.subr.bf16.mxu0 0
    %1257 = vmatpush1.bf16.msra.mxu0 0
    %1258 = vmatprep.subr.bf16.mxu0 0
    %1259 = vmatpush1.bf16.msra.mxu0 0
    %1260 = vmatprep.subr.bf16.mxu0 0
    %1261 = vmatpush1.bf16.msra.mxu0 0
    %1262 = vmatprep.subr.bf16.mxu0 0
    %1263 = vmatpush1.bf16.msra.mxu0 0
    %1264 = vmatprep.subr.bf16.mxu0 0
    %1265 = vmatpush1.bf16.msra.mxu0 0
    %1266 = vmatprep.mubr.bf16.mxu0 %v1229
    %1267 = vmatmul.mubr.bf16.gmra.mrb[0].mxu0 %v1151
    %v1268 = vpop.f32.mrb[0].mxu0
    %v1269 = vadd.f32 0.0, %v1268
    %v1270 = vpop.f32.mrb[0].mxu0
    %v1271 = vpop.f32.mrb[0].mxu0
    %v1272 = vadd.f32 0.0, %v1271
    %v1273 = vpop.f32.mrb[0].mxu0
    %1274 = vmatprep.mubr.bf16.mxu0 %v1232
    %1275 = vmatmul.mubr.bf16.gmra.mrb[0].mxu0 %v1153
    %v1276 = vpop.f32.mrb[0].mxu0
    %v1277 = vadd.f32 0.0, %v1276
    %v1278 = vpop.f32.mrb[0].mxu0
    %v1279 = vpop.f32.mrb[0].mxu0
    %v1280 = vadd.f32 0.0, %v1279
    %v1281 = vpop.f32.mrb[0].mxu0
    %1282 = vdwg.mxu0
    %v1283 = vadd.f32 %v1093, %v1269
    %v1284 = vadd.f32 %v1096, %v1272
    %v1285 = vadd.f32 %v1101, %v1277
    %v1286 = vadd.f32 %v1104, %v1280
    %v1287 = vadd.f32 %v1283, %v1284
    %v1288 = vadd.f32 %v1287, %v1285
    %v1289 = vadd.f32 %v1288, %v1286
    %v1290 = vrot.slane %v1289, 4
    %v1291 = vadd.f32 %v1289, %v1290
    %v1292 = vrot.slane %v1291, 2
    %v1293 = vadd.f32 %v1291, %v1292
    %v1294 = vrot.slane %v1293, 1
    %v1295 = vadd.f32 %v1293, %v1294
    %v1296 = vmul.f32 %v1283, %v1283
    %v1297 = vmul.f32 %v1284, %v1284
    %v1298 = vmul.f32 %v1285, %v1285
    %v1299 = vmul.f32 %v1286, %v1286
    %v1300 = vadd.f32 %v1296, %v1297
    %v1301 = vadd.f32 %v1300, %v1298
    %v1302 = vadd.f32 %v1301, %v1299
    %v1303 = vrot.slane %v1302, 4
    %v1304 = vadd.f32 %v1302, %v1303
    %v1305 = vrot.slane %v1304, 2
    %v1306 = vadd.f32 %v1304, %v1305
    %v1307 = vrot.slane %v1306, 1
    %v1308 = vadd.f32 %v1306, %v1307
    %v1309 = vsel %vm112, %v1295, %v1308
    %1310 = vrot.lane.b32.xlu0 %v1309, 8
    %v1311 = vpop.permute.xlu0 %1310
    %v1312 = vadd.f32 %v1309, %v1311
    %1313 = vrot.lane.b32.xlu0 %v1312, 16
    %v1314 = vpop.permute.xlu0 %1313
    %v1315 = vadd.f32 %v1312, %v1314
    %1316 = vrot.lane.b32.xlu0 %v1315, 32
    %v1317 = vpop.permute.xlu0 %1316
    %v1318 = vadd.f32 %v1315, %v1317
    %1319 = vrot.lane.b32.xlu0 %v1318, 64
    %v1320 = vpop.permute.xlu0 %1319
    %v1321 = vadd.f32 %v1318, %v1320
    %v1322 = vmul.f32 %v1321, 0.001953125
    %v1323 = vmul.f32 %v1322, %v1322
    %v1325 = vrot.slane %v1323, 7
    %v1327 = vsub.f32 %v1322, %v1325
    %v1328 = vadd.f32 %v1327, 1e-05
    %v1329 = vrsqrt.pop %v1328
    %v1330 = vld [vmem:[%s5] sm:$0x1]
    %v1332 = vlaneseq
    %v1333 = vshrl.u32 %v1332, 7
    %v1334 = vsub.s32 0, %v1333
    %v1335 = vrot.slane %v1330, %v1334
    %v1337 = vmul.f32 %v1329, %v1335
    %v1338 = vlaneseq
    %v1339 = vshrl.u32 %v1338, 7
    %v1340 = vsub.s32 0, %v1339
    %v1341 = vrot.slane %v1322, %v1340
    %v1342 = vsub.f32 %v1283, %v1341
    %v1343 = vsub.f32 %v1284, %v1341
    %v1344 = vsub.f32 %v1285, %v1341
    %v1345 = vsub.f32 %v1286, %v1341
    %v1346 = vlaneseq
    %v1347 = vshrl.u32 %v1346, 7
    %v1348 = vsub.s32 1, %v1347
    %v1349 = vrot.slane %v1337, %v1348
    %v1350 = vmul.f32 %v1342, %v1349
    %v1351 = vmul.f32 %v1343, %v1349
    %v1352 = vmul.f32 %v1344, %v1349
    %v1353 = vmul.f32 %v1345, %v1349
    %v1354 = vld [vmem:[%s6] sm:$0x1]
    %v1356 = vlaneseq
    %v1357 = vshrl.u32 %v1356, 7
    %v1358 = vsub.s32 0, %v1357
    %v1359 = vrot.slane %v1354, %v1358
    %v1361 = vadd.f32 %v1350, %v1359
    %v1362 = vadd.f32 %v1351, %v1359
    %v1363 = vadd.f32 %v1352, %v1359
    %v1364 = vadd.f32 %v1353, %v1359
    %v1365 = vadd.f32 %v104, %v1361
    %v1366 = vadd.f32 %v105, %v1362
    %v1367 = vadd.f32 %v106, %v1363
    %v1368 = vadd.f32 %v107, %v1364
    %1369 = vst [vmem:[#allocation10] sm:$0xff] %v1365
    %1370 = vst [vmem:[#allocation10 + $0x8] sm:$0xff] %v1366
    %1371 = vst [vmem:[#allocation10 + $0x10] sm:$0xff] %v1367
    %1372 = vst [vmem:[#allocation10 + $0x18] sm:$0xff] %v1368
    // Predicated region
    $region46: #{tpu_custom_call.1} parent=1 // pred_check
      _
    $region47: #{tpu_custom_call.1} parent=1 // pred_check_branch
      %1374 = sbr.rel (0) target = $region49
    $region48: #{tpu_custom_call.1} parent=1 // pred_region
      %s1376 = ssub.s32 512, 512
      %1377 = vsyncadd [#allocation6], %s1376
      %s1378 = sshll.u32 [#allocation10], 4
      %s1379 = int_to_ptr.vmem [resolvable:$true] %s1378
      %1384 = dma.vmem_to_hbm [thread:$0]  %s1379, 512, %s8, [#allocation6], 128, 128, 8
    $region49: #{tpu_custom_call.1} parent=1 // pred_fallthru
      _
    // Predicated region
    $region50: #{tpu_custom_call.1} parent=1 // pred_check
      _
    $region51: #{tpu_custom_call.1} parent=1 // pred_check_branch
      %1386 = sbr.rel (0) target = $region53
    $region52: #{tpu_custom_call.1} parent=1 // pred_region
      %1387 = dma.done [#allocation6], 512
    $region53: #{tpu_custom_call.1} parent=1 // pred_fallthru
      _
    %1388 = vsyncpa [#allocation5], 1
    %1389 = vsyncpa [#allocation8], 1
    %1390 = vsyncpa [#allocation6], 1

</llo_original>
